<compile_context>
chip_gen: v5e
topology: v5e:2x2
jax: 0.10.0
libtpu: 0.0.40
codegen_flags: <defaults>
</compile_context>

<pallas_src>
import functools

import jax
import jax.numpy as jnp
from jax.experimental import pallas as pl
from jax.experimental.pallas import tpu as pltpu


def _round_up(x, m):
    return (x + m - 1) // m * m


def _default_vmem_limit():
    # Generation-aware scoped-VMEM limit with headroom for compiler scratch.
    try:
        cap = int(pltpu.get_tpu_info().vmem_capacity_bytes)
    except Exception:
        cap = 64 * 1024 * 1024
    return max(32 * 1024 * 1024, min(cap - 16 * 1024 * 1024, 100 * 1024 * 1024))


VMEM_LIMIT_BYTES = _default_vmem_limit()


# ----------------------------------------------------------------------------
# Kernels
# ----------------------------------------------------------------------------
def _pw_conv_bn_kernel(x_ref, w_ref, s_ref, b_ref, o_ref, *, relu):
    # x_ref: (TM, Cin) bf16, w_ref: (Cin, Cout) bf16, s_ref/b_ref: (1, Cout) f32
    y = jnp.dot(x_ref[...], w_ref[...], preferred_element_type=jnp.float32)
    y = y * s_ref[...] + b_ref[...]
    if relu:
        y = jnp.maximum(y, 0.0)
    o_ref[...] = y.astype(o_ref.dtype)


def _pw_conv_bn_add_relu_kernel(x_ref, w_ref, s_ref, b_ref, res_ref, o_ref):
    # 1x1 conv + BN + residual add + ReLU (fused epilogue of the block).
    y = jnp.dot(x_ref[...], w_ref[...], preferred_element_type=jnp.float32)
    y = y * s_ref[...] + b_ref[...]
    y = y + res_ref[...].astype(jnp.float32)
    y = jnp.maximum(y, 0.0)
    o_ref[...] = y.astype(o_ref.dtype)


def _fused_conv12_kernel(x_ref, w1_ref, s1_ref, b1_ref, w2_ref, s2_ref, b2_ref,
                         o_ref, h1p_ref, *, stride, TH, H, W, Wout):
    # x_ref:   (1, H, W, Cin) bf16 image, resident across row blocks (index n).
    # w1_ref:  (Cin, Cp) bf16;  s1/b1: (1, Cp) f32.
    # w2_ref:  (3, 3, Cp, Cp) bf16 (HWIO); s2/b2: (1, Cp) f32.
    # o_ref:   (1, TH, Wout, Cp) bf16 output row block.
    # h1p_ref: (H+2, W+2, Cp) bf16 VMEM slab holding the zero-padded h1 image.
    Cin = x_ref.shape[-1]
    Cp = h1p_ref.shape[-1]
    r = pl.program_id(1)

    @pl.when(r == 0)
    def _():
        # conv1 (1x1) + bn1 + relu for the whole image, written into a
        # zero-padded VMEM slab: handles the 3x3 halo without any HBM pad pass
        # and removes the h1 HBM round trip.
        h1p_ref[...] = jnp.zeros(h1p_ref.shape, h1p_ref.dtype)
        x2d = x_ref[0].reshape(H * W, Cin)
        h1 = jnp.dot(x2d, w1_ref[...], preferred_element_type=jnp.float32)
        h1 = jnp.maximum(h1 * s1_ref[...] + b1_ref[...], 0.0)
        h1p_ref[1:H + 1, 1:W + 1, :] = h1.reshape(H, W, Cp).astype(h1p_ref.dtype)

    oh0 = r * TH                      # first output row of this block
    acc = jnp.zeros((TH * Wout, Cp), jnp.float32)
    for kh in range(3):
        for kw in range(3):
            if stride == 1:
                # Direct ref reads: offsets fold into the vector loads.
                patch = h1p_ref[pl.ds(oh0 + kh, TH), kw:kw + Wout, :]
            else:
                rows = h1p_ref[pl.ds(oh0 * stride + kh, (TH - 1) * stride + 1),
                               kw:kw + (Wout - 1) * stride + 1, :]
                patch = rows[::stride, ::stride, :]
            acc = acc + jnp.dot(patch.reshape(TH * Wout, Cp), w2_ref[kh, kw],
                                preferred_element_type=jnp.float32)
    y = acc * s2_ref[...] + b2_ref[...]
    y = jnp.maximum(y, 0.0)
    o_ref[0] = y.reshape(TH, Wout, Cp).astype(o_ref.dtype)


# ----------------------------------------------------------------------------
# Tiling helpers
# ----------------------------------------------------------------------------
def _row_tiling(rows):
    """Pick a row-tile that divides `rows` exactly (no wrapper-side padding).

    Returns (TM, rows_padded); rows_padded != rows only in the rare fallback
    where no multiple-of-8 divisor <= 512 exists."""
    MAX_TM = 512
    if rows <= MAX_TM:
        return rows, rows                       # single full block
    for d in range(MAX_TM, 7, -8):              # multiples of 8
        if rows % d == 0:
            return d, rows
    return MAX_TM, _round_up(rows, MAX_TM)      # rare fallback: pad


def _choose_th(hout, wout, coutp):
    """Output-row tile for the 3x3 kernel: divisor of hout, targeting a decent
    MXU M (= TH*wout) while keeping the f32 accumulator <= ~1 MiB."""
    best = 1
    for th in range(1, hout + 1):
        if hout % th:
            continue
        m = th * wout
        if m <= max(512, wout) and m * coutp * 4 <= (1 << 20):
            best = th
    return best


# ----------------------------------------------------------------------------
# pallas_call wrappers
# ----------------------------------------------------------------------------
def pointwise_conv_bn(x2d, w, scale, bias, *, relu, out_dtype):
    R, Cin = x2d.shape
    Cout = w.shape[1]
    TM, Rp = _row_tiling(R)
    xin = x2d if Rp == R else jnp.pad(x2d, ((0, Rp - R), (0, 0)))
    kern = functools.partial(_pw_conv_bn_kernel, relu=relu)
    out = pl.pallas_call(
        kern,
        out_shape=jax.ShapeDtypeStruct((Rp, Cout), out_dtype),
        grid=(Rp // TM,),
        in_specs=[
            pl.BlockSpec((TM, Cin), lambda i: (i, 0)),
            pl.BlockSpec((Cin, Cout), lambda i: (0, 0)),   # fetched once
            pl.BlockSpec((1, Cout), lambda i: (0, 0)),
            pl.BlockSpec((1, Cout), lambda i: (0, 0)),
        ],
        out_specs=pl.BlockSpec((TM, Cout), lambda i: (i, 0)),
        compiler_params=pltpu.CompilerParams(
            dimension_semantics=("parallel",),
            vmem_limit_bytes=VMEM_LIMIT_BYTES,
        ),
    )(xin, w, scale.reshape(1, -1).astype(jnp.float32),
      bias.reshape(1, -1).astype(jnp.float32))
    return out if Rp == R else out[:R]


def pointwise_conv_bn_add_relu(x2d, w, scale, bias, res2d, *, out_dtype):
    R, Cin = x2d.shape
    Cout = w.shape[1]
    TM, Rp = _row_tiling(R)
    xin = x2d if Rp == R else jnp.pad(x2d, ((0, Rp - R), (0, 0)))
    rin = res2d if Rp == R else jnp.pad(res2d, ((0, Rp - R), (0, 0)))
    out = pl.pallas_call(
        _pw_conv_bn_add_relu_kernel,
        out_shape=jax.ShapeDtypeStruct((Rp, Cout), out_dtype),
        grid=(Rp // TM,),
        in_specs=[
            pl.BlockSpec((TM, Cin), lambda i: (i, 0)),
            pl.BlockSpec((Cin, Cout), lambda i: (0, 0)),   # fetched once
            pl.BlockSpec((1, Cout), lambda i: (0, 0)),
            pl.BlockSpec((1, Cout), lambda i: (0, 0)),
            pl.BlockSpec((TM, Cout), lambda i: (i, 0)),
        ],
        out_specs=pl.BlockSpec((TM, Cout), lambda i: (i, 0)),
        compiler_params=pltpu.CompilerParams(
            dimension_semantics=("parallel",),
            vmem_limit_bytes=VMEM_LIMIT_BYTES,
        ),
    )(xin, w, scale.reshape(1, -1).astype(jnp.float32),
      bias.reshape(1, -1).astype(jnp.float32), rin)
    return out if Rp == R else out[:R]


def fused_conv1_conv2(x_nhwc, w1, s1, b1, w2, s2, b2, *, stride):
    """conv1(1x1)+bn1+relu fused with conv2(3x3, pad=1, stride)+bn2+relu."""
    N, H, W, Cin = x_nhwc.shape
    Cp = w1.shape[1]
    Hout = (H + 2 - 3) // stride + 1
    Wout = (W + 2 - 3) // stride + 1
    TH = _choose_th(Hout, Wout, Cp)
    kern = functools.partial(_fused_conv12_kernel, stride=stride, TH=TH,
                             H=H, W=W, Wout=Wout)
    return pl.pallas_call(
        kern,
        out_shape=jax.ShapeDtypeStruct((N, Hout, Wout, Cp), jnp.bfloat16),
        grid=(N, Hout // TH),
        in_specs=[
            pl.BlockSpec((1, H, W, Cin), lambda n, r: (n, 0, 0, 0)),
            pl.BlockSpec((Cin, Cp), lambda n, r: (0, 0)),
            pl.BlockSpec((1, Cp), lambda n, r: (0, 0)),
            pl.BlockSpec((1, Cp), lambda n, r: (0, 0)),
            pl.BlockSpec((3, 3, Cp, Cp), lambda n, r: (0, 0, 0, 0)),
            pl.BlockSpec((1, Cp), lambda n, r: (0, 0)),
            pl.BlockSpec((1, Cp), lambda n, r: (0, 0)),
        ],
        out_specs=pl.BlockSpec((1, TH, Wout, Cp), lambda n, r: (n, r, 0, 0)),
        scratch_shapes=[pltpu.VMEM((H + 2, W + 2, Cp), jnp.bfloat16)],
        compiler_params=pltpu.CompilerParams(
            # Row axis carries the h1 slab (computed at r==0) -> "arbitrary".
            dimension_semantics=("parallel", "arbitrary"),
            vmem_limit_bytes=VMEM_LIMIT_BYTES,
        ),
    )(x_nhwc, w1,
      s1.reshape(1, -1).astype(jnp.float32), b1.reshape(1, -1).astype(jnp.float32),
      w2,
      s2.reshape(1, -1).astype(jnp.float32), b2.reshape(1, -1).astype(jnp.float32))


# ----------------------------------------------------------------------------
# Bottleneck block
# ----------------------------------------------------------------------------
EXPANSION = 4
BN_EPS = 1e-5


def fold_bn(gamma, beta, mean, var):
    scale = gamma / jnp.sqrt(var + BN_EPS)
    bias = beta - mean * scale
    return scale, bias


def init_bottleneck_params(key, in_planes, planes):
    cout = EXPANSION * planes
    ks = jax.random.split(key, 8)

    def bn_params(k, c):
        k1, k2, k3, k4 = jax.random.split(k, 4)
        gamma = 1.0 + 0.1 * jax.random.normal(k1, (c,), jnp.float32)
        beta = 0.1 * jax.random.normal(k2, (c,), jnp.float32)
        mean = 0.05 * jax.random.normal(k3, (c,), jnp.float32)
        var = jnp.abs(1.0 + 0.1 * jax.random.normal(k4, (c,), jnp.float32))
        return fold_bn(gamma, beta, mean, var)

    p = {}
    p["w1"] = 0.1 * jax.random.normal(ks[0], (in_planes, planes), jnp.float32)      # 1x1 (Cin,Cout)
    p["s1"], p["b1"] = bn_params(ks[1], planes)
    p["w2"] = 0.1 * jax.random.normal(ks[2], (3, 3, planes, planes), jnp.float32)   # 3x3 HWIO
    p["s2"], p["b2"] = bn_params(ks[3], planes)
    p["w3"] = 0.1 * jax.random.normal(ks[4], (planes, cout), jnp.float32)           # 1x1 (Cin,Cout)
    p["s3"], p["b3"] = bn_params(ks[5], cout)
    p["wsc"] = 0.1 * jax.random.normal(ks[6], (in_planes, cout), jnp.float32)       # shortcut 1x1
    p["ssc"], p["bsc"] = bn_params(ks[7], cout)
    return p


def prepare_params(p):
    """One-time parameter prep (call OUTSIDE the per-step jit): zero-pad the
    internal `planes` channels to a multiple of 128 (mathematically exact:
    padded scale/bias are zero and padded w3 rows are zero) and cast weights
    to bf16 for the MXU.  Scale/bias stay f32 (epilogue in f32)."""
    bf16 = jnp.bfloat16
    planes = p["w1"].shape[1]
    cp = _round_up(planes, 128)
    pad = cp - planes
    pp = {}
    pp["w1"] = jnp.pad(p["w1"], ((0, 0), (0, pad))).astype(bf16)
    pp["s1"] = jnp.pad(p["s1"], (0, pad))
    pp["b1"] = jnp.pad(p["b1"], (0, pad))
    pp["w2"] = jnp.pad(p["w2"], ((0, 0), (0, 0), (0, pad), (0, pad))).astype(bf16)
    pp["s2"] = jnp.pad(p["s2"], (0, pad))
    pp["b2"] = jnp.pad(p["b2"], (0, pad))
    pp["w3"] = jnp.pad(p["w3"], ((0, pad), (0, 0))).astype(bf16)
    pp["s3"] = p["s3"]
    pp["b3"] = p["b3"]
    pp["wsc"] = p["wsc"].astype(bf16)
    pp["ssc"] = p["ssc"]
    pp["bsc"] = p["bsc"]
    return jax.device_put(pp)


def bottleneck_forward(x_nchw, pp, *, stride=1):
    """Forward pass with pre-prepared params `pp` (see prepare_params)."""
    # TODO(synk): NCHW<->NHWC boundary transposes could be dropped if the
    # surrounding model ran NHWC end-to-end.
    x = jnp.transpose(x_nchw, (0, 2, 3, 1))          # -> NHWC
    xb = x.astype(jnp.bfloat16)
    N, H, W, Cin = x.shape
    Cp = pp["w1"].shape[1]                           # padded planes
    Cout = pp["w3"].shape[1]

    # conv1 + bn1 + relu + conv2 (3x3) + bn2 + relu, fully fused.
    h2 = fused_conv1_conv2(xb, pp["w1"], pp["s1"], pp["b1"],
                           pp["w2"], pp["s2"], pp["b2"], stride=stride)
    _, Ho, Wo, _ = h2.shape

    # shortcut path
    if stride != 1 or Cin != Cout:
        # TODO(synk): fold the stride-2 subsampling into the shortcut kernel's
        # index_map instead of materializing the strided slice.
        xs = xb if stride == 1 else xb[:, ::stride, ::stride, :]
        sc = pointwise_conv_bn(xs.reshape(N * Ho * Wo, Cin), pp["wsc"], pp["ssc"],
                               pp["bsc"], relu=False, out_dtype=jnp.bfloat16)
    else:
        xs = xb if stride == 1 else xb[:, ::stride, ::stride, :]
        sc = xs.reshape(N * Ho * Wo, Cout)

    # conv3 (1x1) + bn3 + residual add + relu (fused), bf16 output store.
    out = pointwise_conv_bn_add_relu(h2.reshape(N * Ho * Wo, Cp), pp["w3"],
                                     pp["s3"], pp["b3"], sc,
                                     out_dtype=jnp.bfloat16)
    out = out.reshape(N, Ho, Wo, Cout)
    return jnp.transpose(out, (0, 3, 1, 2))          # -> NCHW (bf16)


# ----------------------------------------------------------------------------
# Pure-JAX reference with the same bf16 precision path (for correctness check)
# ----------------------------------------------------------------------------
def reference_forward(x_nchw, p, *, stride=1):
    bf16 = jnp.bfloat16
    x = jnp.transpose(x_nchw, (0, 2, 3, 1))
    xb = x.astype(bf16)
    Cin = x.shape[-1]
    Cout = p["w3"].shape[1]

    def conv(xi, w, s, pad):
        return jax.lax.conv_general_dilated(
            xi.astype(bf16), w.astype(bf16), (s, s), [(pad, pad), (pad, pad)],
            dimension_numbers=("NHWC", "HWIO", "NHWC"),
            preferred_element_type=jnp.float32,
        )

    h = conv(xb, p["w1"].reshape(1, 1, *p["w1"].shape), 1, 0) * p["s1"] + p["b1"]
    h = jnp.maximum(h, 0.0).astype(bf16)
    h = conv(h, p["w2"], stride, 1) * p["s2"] + p["b2"]
    h = jnp.maximum(h, 0.0).astype(bf16)
    h = conv(h, p["w3"].reshape(1, 1, *p["w3"].shape), 1, 0) * p["s3"] + p["b3"]
    if stride != 1 or Cin != Cout:
        sc = conv(xb, p["wsc"].reshape(1, 1, *p["wsc"].shape), stride, 0) * p["ssc"] + p["bsc"]
        sc = sc.astype(bf16)
    else:
        sc = xb[:, ::stride, ::stride, :]
    out = jnp.maximum(h + sc.astype(jnp.float32), 0.0)
    return jnp.transpose(out, (0, 3, 1, 2))


if __name__ == "__main__":
    key = jax.random.PRNGKey(0)
    k_x, k_p = jax.random.split(key)

    N, in_planes, H, W = 2, 16, 8, 8
    planes, stride = 32, 1            # output channels = 4 * planes = 128

    x = jax.random.normal(k_x, (N, in_planes, H, W), jnp.float32)
    params = init_bottleneck_params(k_p, in_planes, planes)
    prepared = prepare_params(params)                 # hoisted out of jit

    fwd = jax.jit(functools.partial(bottleneck_forward, stride=stride))
    out = jax.block_until_ready(fwd(x, prepared))

    ref = jax.block_until_ready(reference_forward(x, params, stride=stride))
    assert out.shape == ref.shape, (out.shape, ref.shape)
    out_f32 = out.astype(jnp.float32)
    max_err = float(jnp.max(jnp.abs(out_f32 - ref)))
    assert jnp.allclose(out_f32, ref, atol=6e-2, rtol=6e-2), max_err

    print("KERNEL_OK")
</pallas_src>

<mosaic_0001>
module attributes {stable_mosaic.version = 11 : i64} {
  func.func @_pw_conv_bn_kernel(%arg0: i32, %arg1: memref<128x16xbf16, #tpu.memory_space<vmem>>, %arg2: memref<16x128xbf16, #tpu.memory_space<vmem>>, %arg3: memref<1x128xf32, #tpu.memory_space<vmem>>, %arg4: memref<1x128xf32, #tpu.memory_space<vmem>>, %arg5: memref<128x128xbf16, #tpu.memory_space<vmem>>) attributes {dimension_semantics = [#tpu.dimension_semantics<parallel>], iteration_bounds = array<i64: 1>, scalar_prefetch = 0 : i64, scratch_operands = 0 : i64, tpu.core_type = #tpu.core_type<tc>, window_params = [{transform_indices = @transform_0, window_bounds = array<i64: 128, 16>}, {pipeline_mode = #tpu.pipeline_mode<synchronous>, transform_indices = @transform_1, window_bounds = array<i64: 16, 128>}, {pipeline_mode = #tpu.pipeline_mode<synchronous>, transform_indices = @transform_2, window_bounds = array<i64: 1, 128>}, {pipeline_mode = #tpu.pipeline_mode<synchronous>, transform_indices = @transform_3, window_bounds = array<i64: 1, 128>}, {transform_indices = @transform_4, window_bounds = array<i64: 128, 128>}]} {
    %c0 = arith.constant 0 : index
    %c0_0 = arith.constant 0 : index
    %0 = vector.load %arg1[%c0, %c0_0] : memref<128x16xbf16, #tpu.memory_space<vmem>>, vector<128x16xbf16>
    %c0_1 = arith.constant 0 : index
    %c0_2 = arith.constant 0 : index
    %1 = vector.load %arg2[%c0_1, %c0_2] : memref<16x128xbf16, #tpu.memory_space<vmem>>, vector<16x128xbf16>
    %cst = arith.constant dense<0.000000e+00> : vector<128x128xf32>
    %2 = tpu.matmul %0, %1, %cst {dimension_numbers = #tpu.dot_dimension_numbers<[1], [0], [0], [1], [0, 0, 1, 1], [], []>} : vector<128x16xbf16>, vector<16x128xbf16>, vector<128x128xf32> -> vector<128x128xf32>
    %c0_3 = arith.constant 0 : index
    %c0_4 = arith.constant 0 : index
    %3 = vector.load %arg3[%c0_3, %c0_4] : memref<1x128xf32, #tpu.memory_space<vmem>>, vector<1x128xf32>
    %4 = vector.broadcast %3 : vector<1x128xf32> to vector<128x128xf32>
    %5 = arith.mulf %2, %4 : vector<128x128xf32>
    %c0_5 = arith.constant 0 : index
    %c0_6 = arith.constant 0 : index
    %6 = vector.load %arg4[%c0_5, %c0_6] : memref<1x128xf32, #tpu.memory_space<vmem>>, vector<1x128xf32>
    %7 = vector.broadcast %6 : vector<1x128xf32> to vector<128x128xf32>
    %8 = arith.addf %5, %7 : vector<128x128xf32>
    %9 = arith.truncf %8 : vector<128x128xf32> to vector<128x128xbf16>
    %c0_7 = arith.constant 0 : index
    %c0_8 = arith.constant 0 : index
    %10 = vector.load %arg5[%c0_7, %c0_8] : memref<128x128xbf16, #tpu.memory_space<vmem>>, vector<128x128xbf16>
    tpu.vector_store %arg5[%c0_7, %c0_8], %9 {strides = array<i32>} : memref<128x128xbf16, #tpu.memory_space<vmem>>, vector<128x128xbf16>,
    return
  }
  func.func @transform_0(%arg0: i32) -> (i32, i32) {
    %c0_i32 = arith.constant 0 : i32
    %c0_i32_0 = arith.constant 0 : i32
    return %arg0, %c0_i32 : i32, i32
  }
  func.func @transform_1(%arg0: i32) -> (i32, i32) {
    %c0_i32 = arith.constant 0 : i32
    %c0_i32_0 = arith.constant 0 : i32
    %c0_i32_1 = arith.constant 0 : i32
    return %c0_i32, %c0_i32_0 : i32, i32
  }
  func.func @transform_2(%arg0: i32) -> (i32, i32) {
    %c0_i32 = arith.constant 0 : i32
    %c0_i32_0 = arith.constant 0 : i32
    %c0_i32_1 = arith.constant 0 : i32
    return %c0_i32, %c0_i32_0 : i32, i32
  }
  func.func @transform_3(%arg0: i32) -> (i32, i32) {
    %c0_i32 = arith.constant 0 : i32
    %c0_i32_0 = arith.constant 0 : i32
    %c0_i32_1 = arith.constant 0 : i32
    return %c0_i32, %c0_i32_0 : i32, i32
  }
  func.func @transform_4(%arg0: i32) -> (i32, i32) {
    %c0_i32 = arith.constant 0 : i32
    %c0_i32_0 = arith.constant 0 : i32
    return %arg0, %c0_i32 : i32, i32
  }
}

module attributes {stable_mosaic.version = 11 : i64} {
  func.func @_fused_conv12_kernel(%arg0: i32, %arg1: i32, %arg2: memref<1x8x8x16xbf16, #tpu.memory_space<vmem>>, %arg3: memref<16x128xbf16, #tpu.memory_space<vmem>>, %arg4: memref<1x128xf32, #tpu.memory_space<vmem>>, %arg5: memref<1x128xf32, #tpu.memory_space<vmem>>, %arg6: memref<3x3x128x128xbf16, #tpu.memory_space<vmem>>, %arg7: memref<1x128xf32, #tpu.memory_space<vmem>>, %arg8: memref<1x128xf32, #tpu.memory_space<vmem>>, %arg9: memref<1x8x8x128xbf16, #tpu.memory_space<vmem>>, %arg10: memref<10x10x128xbf16, #tpu.memory_space<vmem>>) attributes {dimension_semantics = [#tpu.dimension_semantics<parallel>, #tpu.dimension_semantics<arbitrary>], iteration_bounds = array<i64: 2, 1>, scalar_prefetch = 0 : i64, scratch_operands = 1 : i64, tpu.core_type = #tpu.core_type<tc>, window_params = [{transform_indices = @transform_0, window_bounds = array<i64: 1, 8, 8, 16>}, {pipeline_mode = #tpu.pipeline_mode<synchronous>, transform_indices = @transform_1, window_bounds = array<i64: 16, 128>}, {pipeline_mode = #tpu.pipeline_mode<synchronous>, transform_indices = @transform_2, window_bounds = array<i64: 1, 128>}, {pipeline_mode = #tpu.pipeline_mode<synchronous>, transform_indices = @transform_3, window_bounds = array<i64: 1, 128>}, {pipeline_mode = #tpu.pipeline_mode<synchronous>, transform_indices = @transform_4, window_bounds = array<i64: 3, 3, 128, 128>}, {pipeline_mode = #tpu.pipeline_mode<synchronous>, transform_indices = @transform_5, window_bounds = array<i64: 1, 128>}, {pipeline_mode = #tpu.pipeline_mode<synchronous>, transform_indices = @transform_6, window_bounds = array<i64: 1, 128>}, {transform_indices = @transform_7, window_bounds = array<i64: 1, 8, 8, 128>}]} {
    %c0_i32 = arith.constant 0 : i32
    %0 = arith.cmpi eq, %arg1, %c0_i32 : i32
    %1 = arith.extui %0 : i1 to i32
    %c0_i32_0 = arith.constant 0 : i32
    %2 = arith.cmpi ne, %1, %c0_i32_0 : i32
    scf.if %2 {
      %cst_77 = arith.constant 0.000000e+00 : bf16
      %90 = vector.broadcast %cst_77 : bf16 to vector<10x10x128xbf16>
      %c0_78 = arith.constant 0 : index
      %c0_79 = arith.constant 0 : index
      %c0_80 = arith.constant 0 : index
      %91 = vector.load %arg10[%c0_78, %c0_79, %c0_80] : memref<10x10x128xbf16, #tpu.memory_space<vmem>>, vector<10x10x128xbf16>
      tpu.vector_store %arg10[%c0_78, %c0_79, %c0_80], %90 {strides = array<i32>} : memref<10x10x128xbf16, #tpu.memory_space<vmem>>, vector<10x10x128xbf16>,
      %c0_81 = arith.constant 0 : index
      %c0_82 = arith.constant 0 : index
      %c0_83 = arith.constant 0 : index
      %c0_84 = arith.constant 0 : index
      %92 = vector.load %arg2[%c0_81, %c0_82, %c0_83, %c0_84] : memref<1x8x8x16xbf16, #tpu.memory_space<vmem>>, vector<1x8x8x16xbf16>
      %93 = vector.shape_cast %92 : vector<1x8x8x16xbf16> to vector<8x8x16xbf16>
      %94 = vector.shape_cast %93 : vector<8x8x16xbf16> to vector<64x16xbf16>
      %c0_85 = arith.constant 0 : index
      %c0_86 = arith.constant 0 : index
      %95 = vector.load %arg3[%c0_85, %c0_86] : memref<16x128xbf16, #tpu.memory_space<vmem>>, vector<16x128xbf16>
      %cst_87 = arith.constant dense<0.000000e+00> : vector<64x128xf32>
      %96 = tpu.matmul %94, %95, %cst_87 {dimension_numbers = #tpu.dot_dimension_numbers<[1], [0], [0], [1], [0, 0, 1, 1], [], []>} : vector<64x16xbf16>, vector<16x128xbf16>, vector<64x128xf32> -> vector<64x128xf32>
      %c0_88 = arith.constant 0 : index
      %c0_89 = arith.constant 0 : index
      %97 = vector.load %arg4[%c0_88, %c0_89] : memref<1x128xf32, #tpu.memory_space<vmem>>, vector<1x128xf32>
      %98 = vector.broadcast %97 : vector<1x128xf32> to vector<64x128xf32>
      %99 = arith.mulf %96, %98 : vector<64x128xf32>
      %c0_90 = arith.constant 0 : index
      %c0_91 = arith.constant 0 : index
      %100 = vector.load %arg5[%c0_90, %c0_91] : memref<1x128xf32, #tpu.memory_space<vmem>>, vector<1x128xf32>
      %101 = vector.broadcast %100 : vector<1x128xf32> to vector<64x128xf32>
      %102 = arith.addf %99, %101 : vector<64x128xf32>
      %cst_92 = arith.constant 0.000000e+00 : f32
      %103 = vector.broadcast %cst_92 : f32 to vector<64x128xf32>
      %104 = arith.maximumf %102, %103 : vector<64x128xf32>
      %105 = vector.shape_cast %104 : vector<64x128xf32> to vector<8x8x128xf32>
      %106 = arith.truncf %105 : vector<8x8x128xf32> to vector<8x8x128xbf16>
      %c1_93 = arith.constant 1 : index
      %c1_94 = arith.constant 1 : index
      %c0_95 = arith.constant 0 : index
      %107 = vector.load %arg10[%c1_93, %c1_94, %c0_95] : memref<10x10x128xbf16, #tpu.memory_space<vmem>>, vector<8x8x128xbf16>
      tpu.vector_store %arg10[%c1_93, %c1_94, %c0_95], %106 {strides = array<i32>} : memref<10x10x128xbf16, #tpu.memory_space<vmem>>, vector<8x8x128xbf16>,
    } else {
    }
    %c8_i32 = arith.constant 8 : i32
    %3 = arith.muli %arg1, %c8_i32 : i32
    %cst = arith.constant 0.000000e+00 : f32
    %4 = vector.broadcast %cst : f32 to vector<64x128xf32>
    %c0_i32_1 = arith.constant 0 : i32
    %5 = arith.addi %3, %c0_i32_1 : i32
    %6 = arith.index_cast %5 : i32 to index
    %c0 = arith.constant 0 : index
    %c0_2 = arith.constant 0 : index
    %7 = vector.load %arg10[%6, %c0, %c0_2] : memref<10x10x128xbf16, #tpu.memory_space<vmem>>, vector<8x8x128xbf16>
    %8 = vector.shape_cast %7 : vector<8x8x128xbf16> to vector<64x128xbf16>
    %c0_3 = arith.constant 0 : index
    %c0_4 = arith.constant 0 : index
    %c0_5 = arith.constant 0 : index
    %c0_6 = arith.constant 0 : index
    %9 = vector.load %arg6[%c0_3, %c0_4, %c0_5, %c0_6] : memref<3x3x128x128xbf16, #tpu.memory_space<vmem>>, vector<1x1x128x128xbf16>
    %10 = vector.shape_cast %9 : vector<1x1x128x128xbf16> to vector<128x128xbf16>
    %cst_7 = arith.constant dense<0.000000e+00> : vector<64x128xf32>
    %11 = tpu.matmul %8, %10, %cst_7 {dimension_numbers = #tpu.dot_dimension_numbers<[1], [0], [0], [1], [0, 0, 1, 1], [], []>} : vector<64x128xbf16>, vector<128x128xbf16>, vector<64x128xf32> -> vector<64x128xf32>
    %12 = arith.addf %4, %11 : vector<64x128xf32>
    %c0_i32_8 = arith.constant 0 : i32
    %13 = arith.addi %3, %c0_i32_8 : i32
    %14 = arith.index_cast %13 : i32 to index
    %c1 = arith.constant 1 : index
    %c0_9 = arith.constant 0 : index
    %15 = vector.load %arg10[%14, %c1, %c0_9] : memref<10x10x128xbf16, #tpu.memory_space<vmem>>, vector<8x8x128xbf16>
    %16 = vector.shape_cast %15 : vector<8x8x128xbf16> to vector<64x128xbf16>
    %c0_10 = arith.constant 0 : index
    %c1_11 = arith.constant 1 : index
    %c0_12 = arith.constant 0 : index
    %c0_13 = arith.constant 0 : index
    %17 = vector.load %arg6[%c0_10, %c1_11, %c0_12, %c0_13] : memref<3x3x128x128xbf16, #tpu.memory_space<vmem>>, vector<1x1x128x128xbf16>
    %18 = vector.shape_cast %17 : vector<1x1x128x128xbf16> to vector<128x128xbf16>
    %cst_14 = arith.constant dense<0.000000e+00> : vector<64x128xf32>
    %19 = tpu.matmul %16, %18, %cst_14 {dimension_numbers = #tpu.dot_dimension_numbers<[1], [0], [0], [1], [0, 0, 1, 1], [], []>} : vector<64x128xbf16>, vector<128x128xbf16>, vector<64x128xf32> -> vector<64x128xf32>
    %20 = arith.addf %12, %19 : vector<64x128xf32>
    %c0_i32_15 = arith.constant 0 : i32
    %21 = arith.addi %3, %c0_i32_15 : i32
    %22 = arith.index_cast %21 : i32 to index
    %c2 = arith.constant 2 : index
    %c0_16 = arith.constant 0 : index
    %23 = vector.load %arg10[%22, %c2, %c0_16] : memref<10x10x128xbf16, #tpu.memory_space<vmem>>, vector<8x8x128xbf16>
    %24 = vector.shape_cast %23 : vector<8x8x128xbf16> to vector<64x128xbf16>
    %c0_17 = arith.constant 0 : index
    %c2_18 = arith.constant 2 : index
    %c0_19 = arith.constant 0 : index
    %c0_20 = arith.constant 0 : index
    %25 = vector.load %arg6[%c0_17, %c2_18, %c0_19, %c0_20] : memref<3x3x128x128xbf16, #tpu.memory_space<vmem>>, vector<1x1x128x128xbf16>
    %26 = vector.shape_cast %25 : vector<1x1x128x128xbf16> to vector<128x128xbf16>
    %cst_21 = arith.constant dense<0.000000e+00> : vector<64x128xf32>
    %27 = tpu.matmul %24, %26, %cst_21 {dimension_numbers = #tpu.dot_dimension_numbers<[1], [0], [0], [1], [0, 0, 1, 1], [], []>} : vector<64x128xbf16>, vector<128x128xbf16>, vector<64x128xf32> -> vector<64x128xf32>
    %28 = arith.addf %20, %27 : vector<64x128xf32>
    %c1_i32 = arith.constant 1 : i32
    %29 = arith.addi %3, %c1_i32 : i32
    %30 = arith.index_cast %29 : i32 to index
    %c0_22 = arith.constant 0 : index
    %c0_23 = arith.constant 0 : index
    %31 = vector.load %arg10[%30, %c0_22, %c0_23] : memref<10x10x128xbf16, #tpu.memory_space<vmem>>, vector<8x8x128xbf16>
    %32 = vector.shape_cast %31 : vector<8x8x128xbf16> to vector<64x128xbf16>
    %c1_24 = arith.constant 1 : index
    %c0_25 = arith.constant 0 : index
    %c0_26 = arith.constant 0 : index
    %c0_27 = arith.constant 0 : index
    %33 = vector.load %arg6[%c1_24, %c0_25, %c0_26, %c0_27] : memref<3x3x128x128xbf16, #tpu.memory_space<vmem>>, vector<1x1x128x128xbf16>
    %34 = vector.shape_cast %33 : vector<1x1x128x128xbf16> to vector<128x128xbf16>
    %cst_28 = arith.constant dense<0.000000e+00> : vector<64x128xf32>
    %35 = tpu.matmul %32, %34, %cst_28 {dimension_numbers = #tpu.dot_dimension_numbers<[1], [0], [0], [1], [0, 0, 1, 1], [], []>} : vector<64x128xbf16>, vector<128x128xbf16>, vector<64x128xf32> -> vector<64x128xf32>
    %36 = arith.addf %28, %35 : vector<64x128xf32>
    %c1_i32_29 = arith.constant 1 : i32
    %37 = arith.addi %3, %c1_i32_29 : i32
    %38 = arith.index_cast %37 : i32 to index
    %c1_30 = arith.constant 1 : index
    %c0_31 = arith.constant 0 : index
    %39 = vector.load %arg10[%38, %c1_30, %c0_31] : memref<10x10x128xbf16, #tpu.memory_space<vmem>>, vector<8x8x128xbf16>
    %40 = vector.shape_cast %39 : vector<8x8x128xbf16> to vector<64x128xbf16>
    %c1_32 = arith.constant 1 : index
    %c1_33 = arith.constant 1 : index
    %c0_34 = arith.constant 0 : index
    %c0_35 = arith.constant 0 : index
    %41 = vector.load %arg6[%c1_32, %c1_33, %c0_34, %c0_35] : memref<3x3x128x128xbf16, #tpu.memory_space<vmem>>, vector<1x1x128x128xbf16>
    %42 = vector.shape_cast %41 : vector<1x1x128x128xbf16> to vector<128x128xbf16>
    %cst_36 = arith.constant dense<0.000000e+00> : vector<64x128xf32>
    %43 = tpu.matmul %40, %42, %cst_36 {dimension_numbers = #tpu.dot_dimension_numbers<[1], [0], [0], [1], [0, 0, 1, 1], [], []>} : vector<64x128xbf16>, vector<128x128xbf16>, vector<64x128xf32> -> vector<64x128xf32>
    %44 = arith.addf %36, %43 : vector<64x128xf32>
    %c1_i32_37 = arith.constant 1 : i32
    %45 = arith.addi %3, %c1_i32_37 : i32
    %46 = arith.index_cast %45 : i32 to index
    %c2_38 = arith.constant 2 : index
    %c0_39 = arith.constant 0 : index
    %47 = vector.load %arg10[%46, %c2_38, %c0_39] : memref<10x10x128xbf16, #tpu.memory_space<vmem>>, vector<8x8x128xbf16>
    %48 = vector.shape_cast %47 : vector<8x8x128xbf16> to vector<64x128xbf16>
    %c1_40 = arith.constant 1 : index
    %c2_41 = arith.constant 2 : index
    %c0_42 = arith.constant 0 : index
    %c0_43 = arith.constant 0 : index
    %49 = vector.load %arg6[%c1_40, %c2_41, %c0_42, %c0_43] : memref<3x3x128x128xbf16, #tpu.memory_space<vmem>>, vector<1x1x128x128xbf16>
    %50 = vector.shape_cast %49 : vector<1x1x128x128xbf16> to vector<128x128xbf16>
    %cst_44 = arith.constant dense<0.000000e+00> : vector<64x128xf32>
    %51 = tpu.matmul %48, %50, %cst_44 {dimension_numbers = #tpu.dot_dimension_numbers<[1], [0], [0], [1], [0, 0, 1, 1], [], []>} : vector<64x128xbf16>, vector<128x128xbf16>, vector<64x128xf32> -> vector<64x128xf32>
    %52 = arith.addf %44, %51 : vector<64x128xf32>
    %c2_i32 = arith.constant 2 : i32
    %53 = arith.addi %3, %c2_i32 : i32
    %54 = arith.index_cast %53 : i32 to index
    %c0_45 = arith.constant 0 : index
    %c0_46 = arith.constant 0 : index
    %55 = vector.load %arg10[%54, %c0_45, %c0_46] : memref<10x10x128xbf16, #tpu.memory_space<vmem>>, vector<8x8x128xbf16>
    %56 = vector.shape_cast %55 : vector<8x8x128xbf16> to vector<64x128xbf16>
    %c2_47 = arith.constant 2 : index
    %c0_48 = arith.constant 0 : index
    %c0_49 = arith.constant 0 : index
    %c0_50 = arith.constant 0 : index
    %57 = vector.load %arg6[%c2_47, %c0_48, %c0_49, %c0_50] : memref<3x3x128x128xbf16, #tpu.memory_space<vmem>>, vector<1x1x128x128xbf16>
    %58 = vector.shape_cast %57 : vector<1x1x128x128xbf16> to vector<128x128xbf16>
    %cst_51 = arith.constant dense<0.000000e+00> : vector<64x128xf32>
    %59 = tpu.matmul %56, %58, %cst_51 {dimension_numbers = #tpu.dot_dimension_numbers<[1], [0], [0], [1], [0, 0, 1, 1], [], []>} : vector<64x128xbf16>, vector<128x128xbf16>, vector<64x128xf32> -> vector<64x128xf32>
    %60 = arith.addf %52, %59 : vector<64x128xf32>
    %c2_i32_52 = arith.constant 2 : i32
    %61 = arith.addi %3, %c2_i32_52 : i32
    %62 = arith.index_cast %61 : i32 to index
    %c1_53 = arith.constant 1 : index
    %c0_54 = arith.constant 0 : index
    %63 = vector.load %arg10[%62, %c1_53, %c0_54] : memref<10x10x128xbf16, #tpu.memory_space<vmem>>, vector<8x8x128xbf16>
    %64 = vector.shape_cast %63 : vector<8x8x128xbf16> to vector<64x128xbf16>
    %c2_55 = arith.constant 2 : index
    %c1_56 = arith.constant 1 : index
    %c0_57 = arith.constant 0 : index
    %c0_58 = arith.constant 0 : index
    %65 = vector.load %arg6[%c2_55, %c1_56, %c0_57, %c0_58] : memref<3x3x128x128xbf16, #tpu.memory_space<vmem>>, vector<1x1x128x128xbf16>
    %66 = vector.shape_cast %65 : vector<1x1x128x128xbf16> to vector<128x128xbf16>
    %cst_59 = arith.constant dense<0.000000e+00> : vector<64x128xf32>
    %67 = tpu.matmul %64, %66, %cst_59 {dimension_numbers = #tpu.dot_dimension_numbers<[1], [0], [0], [1], [0, 0, 1, 1], [], []>} : vector<64x128xbf16>, vector<128x128xbf16>, vector<64x128xf32> -> vector<64x128xf32>
    %68 = arith.addf %60, %67 : vector<64x128xf32>
    %c2_i32_60 = arith.constant 2 : i32
    %69 = arith.addi %3, %c2_i32_60 : i32
    %70 = arith.index_cast %69 : i32 to index
    %c2_61 = arith.constant 2 : index
    %c0_62 = arith.constant 0 : index
    %71 = vector.load %arg10[%70, %c2_61, %c0_62] : memref<10x10x128xbf16, #tpu.memory_space<vmem>>, vector<8x8x128xbf16>
    %72 = vector.shape_cast %71 : vector<8x8x128xbf16> to vector<64x128xbf16>
    %c2_63 = arith.constant 2 : index
    %c2_64 = arith.constant 2 : index
    %c0_65 = arith.constant 0 : index
    %c0_66 = arith.constant 0 : index
    %73 = vector.load %arg6[%c2_63, %c2_64, %c0_65, %c0_66] : memref<3x3x128x128xbf16, #tpu.memory_space<vmem>>, vector<1x1x128x128xbf16>
    %74 = vector.shape_cast %73 : vector<1x1x128x128xbf16> to vector<128x128xbf16>
    %cst_67 = arith.constant dense<0.000000e+00> : vector<64x128xf32>
    %75 = tpu.matmul %72, %74, %cst_67 {dimension_numbers = #tpu.dot_dimension_numbers<[1], [0], [0], [1], [0, 0, 1, 1], [], []>} : vector<64x128xbf16>, vector<128x128xbf16>, vector<64x128xf32> -> vector<64x128xf32>
    %76 = arith.addf %68, %75 : vector<64x128xf32>
    %c0_68 = arith.constant 0 : index
    %c0_69 = arith.constant 0 : index
    %77 = vector.load %arg7[%c0_68, %c0_69] : memref<1x128xf32, #tpu.memory_space<vmem>>, vector<1x128xf32>
    %78 = vector.broadcast %77 : vector<1x128xf32> to vector<64x128xf32>
    %79 = arith.mulf %76, %78 : vector<64x128xf32>
    %c0_70 = arith.constant 0 : index
    %c0_71 = arith.constant 0 : index
    %80 = vector.load %arg8[%c0_70, %c0_71] : memref<1x128xf32, #tpu.memory_space<vmem>>, vector<1x128xf32>
    %81 = vector.broadcast %80 : vector<1x128xf32> to vector<64x128xf32>
    %82 = arith.addf %79, %81 : vector<64x128xf32>
    %cst_72 = arith.constant 0.000000e+00 : f32
    %83 = vector.broadcast %cst_72 : f32 to vector<64x128xf32>
    %84 = arith.maximumf %82, %83 : vector<64x128xf32>
    %85 = vector.shape_cast %84 : vector<64x128xf32> to vector<8x8x128xf32>
    %86 = arith.truncf %85 : vector<8x8x128xf32> to vector<8x8x128xbf16>
    %c0_73 = arith.constant 0 : index
    %c0_74 = arith.constant 0 : index
    %c0_75 = arith.constant 0 : index
    %c0_76 = arith.constant 0 : index
    %87 = vector.load %arg9[%c0_73, %c0_74, %c0_75, %c0_76] : memref<1x8x8x128xbf16, #tpu.memory_space<vmem>>, vector<1x8x8x128xbf16>
    %88 = vector.shape_cast %87 : vector<1x8x8x128xbf16> to vector<8x8x128xbf16>
    %89 = vector.shape_cast %86 : vector<8x8x128xbf16> to vector<1x8x8x128xbf16>
    tpu.vector_store %arg9[%c0_73, %c0_74, %c0_75, %c0_76], %89 {strides = array<i32>} : memref<1x8x8x128xbf16, #tpu.memory_space<vmem>>, vector<1x8x8x128xbf16>,
    return
  }
  func.func @transform_0(%arg0: i32, %arg1: i32) -> (i32, i32, i32, i32) {
    %c0_i32 = arith.constant 0 : i32
    %c0_i32_0 = arith.constant 0 : i32
    %c0_i32_1 = arith.constant 0 : i32
    %c0_i32_2 = arith.constant 0 : i32
    return %arg0, %c0_i32, %c0_i32_0, %c0_i32_1 : i32, i32, i32, i32
  }
  func.func @transform_1(%arg0: i32, %arg1: i32) -> (i32, i32) {
    %c0_i32 = arith.constant 0 : i32
    %c0_i32_0 = arith.constant 0 : i32
    %c0_i32_1 = arith.constant 0 : i32
    return %c0_i32, %c0_i32_0 : i32, i32
  }
  func.func @transform_2(%arg0: i32, %arg1: i32) -> (i32, i32) {
    %c0_i32 = arith.constant 0 : i32
    %c0_i32_0 = arith.constant 0 : i32
    %c0_i32_1 = arith.constant 0 : i32
    return %c0_i32, %c0_i32_0 : i32, i32
  }
  func.func @transform_3(%arg0: i32, %arg1: i32) -> (i32, i32) {
    %c0_i32 = arith.constant 0 : i32
    %c0_i32_0 = arith.constant 0 : i32
    %c0_i32_1 = arith.constant 0 : i32
    return %c0_i32, %c0_i32_0 : i32, i32
  }
  func.func @transform_4(%arg0: i32, %arg1: i32) -> (i32, i32, i32, i32) {
    %c0_i32 = arith.constant 0 : i32
    %c0_i32_0 = arith.constant 0 : i32
    %c0_i32_1 = arith.constant 0 : i32
    %c0_i32_2 = arith.constant 0 : i32
    %c0_i32_3 = arith.constant 0 : i32
    return %c0_i32, %c0_i32_0, %c0_i32_1, %c0_i32_2 : i32, i32, i32, i32
  }
  func.func @transform_5(%arg0: i32, %arg1: i32) -> (i32, i32) {
    %c0_i32 = arith.constant 0 : i32
    %c0_i32_0 = arith.constant 0 : i32
    %c0_i32_1 = arith.constant 0 : i32
    return %c0_i32, %c0_i32_0 : i32, i32
  }
  func.func @transform_6(%arg0: i32, %arg1: i32) -> (i32, i32) {
    %c0_i32 = arith.constant 0 : i32
    %c0_i32_0 = arith.constant 0 : i32
    %c0_i32_1 = arith.constant 0 : i32
    return %c0_i32, %c0_i32_0 : i32, i32
  }
  func.func @transform_7(%arg0: i32, %arg1: i32) -> (i32, i32, i32, i32) {
    %c0_i32 = arith.constant 0 : i32
    %c0_i32_0 = arith.constant 0 : i32
    %c0_i32_1 = arith.constant 0 : i32
    return %arg0, %arg1, %c0_i32, %c0_i32_0 : i32, i32, i32, i32
  }
}

module attributes {stable_mosaic.version = 11 : i64} {
  func.func @_pw_conv_bn_add_relu_kernel(%arg0: i32, %arg1: memref<128x128xbf16, #tpu.memory_space<vmem>>, %arg2: memref<128x128xbf16, #tpu.memory_space<vmem>>, %arg3: memref<1x128xf32, #tpu.memory_space<vmem>>, %arg4: memref<1x128xf32, #tpu.memory_space<vmem>>, %arg5: memref<128x128xbf16, #tpu.memory_space<vmem>>, %arg6: memref<128x128xbf16, #tpu.memory_space<vmem>>) attributes {dimension_semantics = [#tpu.dimension_semantics<parallel>], iteration_bounds = array<i64: 1>, scalar_prefetch = 0 : i64, scratch_operands = 0 : i64, tpu.core_type = #tpu.core_type<tc>, window_params = [{transform_indices = @transform_0, window_bounds = array<i64: 128, 128>}, {pipeline_mode = #tpu.pipeline_mode<synchronous>, transform_indices = @transform_1, window_bounds = array<i64: 128, 128>}, {pipeline_mode = #tpu.pipeline_mode<synchronous>, transform_indices = @transform_2, window_bounds = array<i64: 1, 128>}, {pipeline_mode = #tpu.pipeline_mode<synchronous>, transform_indices = @transform_3, window_bounds = array<i64: 1, 128>}, {transform_indices = @transform_4, window_bounds = array<i64: 128, 128>}, {transform_indices = @transform_5, window_bounds = array<i64: 128, 128>}]} {
    %c0 = arith.constant 0 : index
    %c0_0 = arith.constant 0 : index
    %0 = vector.load %arg1[%c0, %c0_0] : memref<128x128xbf16, #tpu.memory_space<vmem>>, vector<128x128xbf16>
    %c0_1 = arith.constant 0 : index
    %c0_2 = arith.constant 0 : index
    %1 = vector.load %arg2[%c0_1, %c0_2] : memref<128x128xbf16, #tpu.memory_space<vmem>>, vector<128x128xbf16>
    %cst = arith.constant dense<0.000000e+00> : vector<128x128xf32>
    %2 = tpu.matmul %0, %1, %cst {dimension_numbers = #tpu.dot_dimension_numbers<[1], [0], [0], [1], [0, 0, 1, 1], [], []>} : vector<128x128xbf16>, vector<128x128xbf16>, vector<128x128xf32> -> vector<128x128xf32>
    %c0_3 = arith.constant 0 : index
    %c0_4 = arith.constant 0 : index
    %3 = vector.load %arg3[%c0_3, %c0_4] : memref<1x128xf32, #tpu.memory_space<vmem>>, vector<1x128xf32>
    %4 = vector.broadcast %3 : vector<1x128xf32> to vector<128x128xf32>
    %5 = arith.mulf %2, %4 : vector<128x128xf32>
    %c0_5 = arith.constant 0 : index
    %c0_6 = arith.constant 0 : index
    %6 = vector.load %arg4[%c0_5, %c0_6] : memref<1x128xf32, #tpu.memory_space<vmem>>, vector<1x128xf32>
    %7 = vector.broadcast %6 : vector<1x128xf32> to vector<128x128xf32>
    %8 = arith.addf %5, %7 : vector<128x128xf32>
    %c0_7 = arith.constant 0 : index
    %c0_8 = arith.constant 0 : index
    %9 = vector.load %arg5[%c0_7, %c0_8] : memref<128x128xbf16, #tpu.memory_space<vmem>>, vector<128x128xbf16>
    %10 = arith.extf %9 : vector<128x128xbf16> to vector<128x128xf32>
    %11 = arith.addf %8, %10 : vector<128x128xf32>
    %cst_9 = arith.constant 0.000000e+00 : f32
    %12 = vector.broadcast %cst_9 : f32 to vector<128x128xf32>
    %13 = arith.maximumf %11, %12 : vector<128x128xf32>
    %14 = arith.truncf %13 : vector<128x128xf32> to vector<128x128xbf16>
    %c0_10 = arith.constant 0 : index
    %c0_11 = arith.constant 0 : index
    %15 = vector.load %arg6[%c0_10, %c0_11] : memref<128x128xbf16, #tpu.memory_space<vmem>>, vector<128x128xbf16>
    tpu.vector_store %arg6[%c0_10, %c0_11], %14 {strides = array<i32>} : memref<128x128xbf16, #tpu.memory_space<vmem>>, vector<128x128xbf16>,
    return
  }
  func.func @transform_0(%arg0: i32) -> (i32, i32) {
    %c0_i32 = arith.constant 0 : i32
    %c0_i32_0 = arith.constant 0 : i32
    return %arg0, %c0_i32 : i32, i32
  }
  func.func @transform_1(%arg0: i32) -> (i32, i32) {
    %c0_i32 = arith.constant 0 : i32
    %c0_i32_0 = arith.constant 0 : i32
    %c0_i32_1 = arith.constant 0 : i32
    return %c0_i32, %c0_i32_0 : i32, i32
  }
  func.func @transform_2(%arg0: i32) -> (i32, i32) {
    %c0_i32 = arith.constant 0 : i32
    %c0_i32_0 = arith.constant 0 : i32
    %c0_i32_1 = arith.constant 0 : i32
    return %c0_i32, %c0_i32_0 : i32, i32
  }
  func.func @transform_3(%arg0: i32) -> (i32, i32) {
    %c0_i32 = arith.constant 0 : i32
    %c0_i32_0 = arith.constant 0 : i32
    %c0_i32_1 = arith.constant 0 : i32
    return %c0_i32, %c0_i32_0 : i32, i32
  }
  func.func @transform_4(%arg0: i32) -> (i32, i32) {
    %c0_i32 = arith.constant 0 : i32
    %c0_i32_0 = arith.constant 0 : i32
    return %arg0, %c0_i32 : i32, i32
  }
  func.func @transform_5(%arg0: i32) -> (i32, i32) {
    %c0_i32 = arith.constant 0 : i32
    %c0_i32_0 = arith.constant 0 : i32
    return %arg0, %c0_i32 : i32, i32
  }
}

</mosaic_0001>

<llo_original>
// kernel: bottleneck_forward.4
$region0: #{bottleneck_forward.4}
  #allocation0 [shape = 'u32[]', space=smem, size = 0x4, offset = 0x4, fixed_abs, tag = 'smem constant byte address 0x4 - core index']
  #allocation1 [shape = 'u32[72,128]{1,0:T(1,128)}', space=vmem, size = 0x9000, scoped, tag = 'internal scratch']
  %s0 = inlined_call_operand.vmem [shape: bf16[128,16], index: 0, kind: input, shape index: {}]
  %s1 = inlined_call_operand.vmem [shape: bf16[16,128], index: 1, kind: input, shape index: {}]
  %s2 = inlined_call_operand.vmem [shape: f32[1,128], index: 2, kind: input, shape index: {}]
  %s3 = inlined_call_operand.vmem [shape: f32[1,128], index: 3, kind: input, shape index: {}]
  %s4 = inlined_call_operand.vmem [shape: bf16[128,128], index: 4, kind: output, shape index: {}]
  %s5 = sld [smem:[#allocation0]]
  $region26: #{bottleneck_forward.4} parent=0
    _
  %s7 = ssub.s32 1, %s5
  %s8 = scalar_select 0, %s7, %s5
  // Predicated region
  $region2: #{bottleneck_forward.4} parent=0 // pred_check
    _
  $region3: #{bottleneck_forward.4} parent=0 // pred_check_branch
    %10 = sbr.rel (0) target = $region5
  $region4: #{bottleneck_forward.4} parent=0 // pred_region
    _
  $region5: #{bottleneck_forward.4} parent=0 // pred_fallthru
    _
  // Predicated region
  $region6: #{bottleneck_forward.4} parent=0 // pred_check
    _
  $region7: #{bottleneck_forward.4} parent=0 // pred_check_branch
    %12 = sbr.rel (0) target = $region9
  $region8: #{bottleneck_forward.4} parent=0 // pred_region
    _
  $region9: #{bottleneck_forward.4} parent=0 // pred_fallthru
    _
  // Predicated region
  $region10: #{bottleneck_forward.4} parent=0 // pred_check
    _
  $region11: #{bottleneck_forward.4} parent=0 // pred_check_branch
    %14 = sbr.rel (0) target = $region13
  $region12: #{bottleneck_forward.4} parent=0 // pred_region
    _
  $region13: #{bottleneck_forward.4} parent=0 // pred_fallthru
    _
  // Predicated region
  $region14: #{bottleneck_forward.4} parent=0 // pred_check
    _
  $region15: #{bottleneck_forward.4} parent=0 // pred_check_branch
    %16 = sbr.rel (0) target = $region17
  $region16: #{bottleneck_forward.4} parent=0 // pred_region
    _
  $region17: #{bottleneck_forward.4} parent=0 // pred_fallthru
    _
  %v18 = vld [vmem:[%s0] sm:$0xf]
  %v19 = vld [vmem:[%s0 + $0x4] sm:$0xf]
  %v20 = vld [vmem:[%s0 + $0x8] sm:$0xf]
  %v21 = vld [vmem:[%s0 + $0xc] sm:$0xf]
  %v22 = vld [vmem:[%s0 + $0x10] sm:$0xf]
  %v23 = vld [vmem:[%s0 + $0x14] sm:$0xf]
  %v24 = vld [vmem:[%s0 + $0x18] sm:$0xf]
  %v25 = vld [vmem:[%s0 + $0x1c] sm:$0xf]
  %v26 = vld [vmem:[%s0 + $0x20] sm:$0xf]
  %v27 = vld [vmem:[%s0 + $0x24] sm:$0xf]
  %v28 = vld [vmem:[%s0 + $0x28] sm:$0xf]
  %v29 = vld [vmem:[%s0 + $0x2c] sm:$0xf]
  %v30 = vld [vmem:[%s0 + $0x30] sm:$0xf]
  %v31 = vld [vmem:[%s0 + $0x34] sm:$0xf]
  %v32 = vld [vmem:[%s0 + $0x38] sm:$0xf]
  %v33 = vld [vmem:[%s0 + $0x3c] sm:$0xf]
  %v34 = vld [vmem:[%s1] sm:$0xf]
  %v35 = vld [vmem:[%s1 + $0x4] sm:$0xf]
  %v52 = vunpack.c.l.b16 %v18
  %v53 = vunpack.c.l.b16 %v19
  %v54 = vunpack.c.l.b16 %v20
  %v55 = vunpack.c.l.b16 %v21
  %v56 = vunpack.c.l.b16 %v22
  %v57 = vunpack.c.l.b16 %v23
  %v58 = vunpack.c.l.b16 %v24
  %v59 = vunpack.c.l.b16 %v25
  %v60 = vunpack.c.l.b16 %v26
  %v61 = vunpack.c.l.b16 %v27
  %v62 = vunpack.c.l.b16 %v28
  %v63 = vunpack.c.l.b16 %v29
  %v64 = vunpack.c.l.b16 %v30
  %v65 = vunpack.c.l.b16 %v31
  %v66 = vunpack.c.l.b16 %v32
  %v67 = vunpack.c.l.b16 %v33
  %v68 = vpack.c.b16 %v53, %v52
  %v69 = vpack.c.b16 %v55, %v54
  %v70 = vpack.c.b16 %v57, %v56
  %v71 = vpack.c.b16 %v59, %v58
  %v72 = vpack.c.b16 %v61, %v60
  %v73 = vpack.c.b16 %v63, %v62
  %v74 = vpack.c.b16 %v65, %v64
  %v75 = vpack.c.b16 %v67, %v66
  %v78 = vunpack.c.l.b16 %v34
  %v79 = vunpack.c.l.b16 %v35
  %v80 = vpack.c.b16 %v79, %v78
  %vm82 = vcmask 130048
  %v84 = vsel %vm82, %v68, 0
  %v87 = vsel %vm82, %v69, 0
  %v90 = vsel %vm82, %v70, 0
  %v93 = vsel %vm82, %v71, 0
  %v96 = vsel %vm82, %v72, 0
  %v99 = vsel %vm82, %v73, 0
  %v102 = vsel %vm82, %v74, 0
  %v105 = vsel %vm82, %v75, 0
  %107 = vmatpush.bf16.msra.mxu0 0
  %108 = vmatpush.bf16.msra.mxu0 0
  %109 = vmatpush.bf16.msra.mxu0 0
  %110 = vmatpush.bf16.msra.mxu0 0
  %111 = vmatpush.bf16.msra.mxu0 0
  %112 = vmatpush.bf16.msra.mxu0 0
  %113 = vmatpush.bf16.msra.mxu0 0
  %114 = vmatpush.bf16.msra.mxu0 %v80
  %115 = vmatmul.bf16.gmra.mxu0 %v84
  %v116 = vpop.f32.mrf.mxu0
  %v117 = vadd.f32 0.0, %v116
  %v118 = vpop.f32.mrf.mxu0
  %v119 = vadd.f32 0.0, %v118
  %120 = vmatmul.bf16.gmra.mxu0 %v87
  %v121 = vpop.f32.mrf.mxu0
  %v122 = vadd.f32 0.0, %v121
  %v123 = vpop.f32.mrf.mxu0
  %v124 = vadd.f32 0.0, %v123
  %125 = vmatmul.bf16.gmra.mxu0 %v90
  %v126 = vpop.f32.mrf.mxu0
  %v127 = vadd.f32 0.0, %v126
  %v128 = vpop.f32.mrf.mxu0
  %v129 = vadd.f32 0.0, %v128
  %130 = vmatmul.bf16.gmra.mxu0 %v93
  %v131 = vpop.f32.mrf.mxu0
  %v132 = vadd.f32 0.0, %v131
  %v133 = vpop.f32.mrf.mxu0
  %v134 = vadd.f32 0.0, %v133
  %135 = vmatmul.bf16.gmra.mxu0 %v96
  %v136 = vpop.f32.mrf.mxu0
  %v137 = vadd.f32 0.0, %v136
  %v138 = vpop.f32.mrf.mxu0
  %v139 = vadd.f32 0.0, %v138
  %140 = vmatmul.bf16.gmra.mxu0 %v99
  %v141 = vpop.f32.mrf.mxu0
  %v142 = vadd.f32 0.0, %v141
  %v143 = vpop.f32.mrf.mxu0
  %v144 = vadd.f32 0.0, %v143
  %145 = vmatmul.bf16.gmra.mxu0 %v102
  %v146 = vpop.f32.mrf.mxu0
  %v147 = vadd.f32 0.0, %v146
  %v148 = vpop.f32.mrf.mxu0
  %v149 = vadd.f32 0.0, %v148
  %150 = vmatmul.bf16.gmra.mxu0 %v105
  %v151 = vpop.f32.mrf.mxu0
  %v152 = vadd.f32 0.0, %v151
  %v153 = vpop.f32.mrf.mxu0
  %v154 = vadd.f32 0.0, %v153
  %155 = vdwg.mxu0
  %v156 = vld [vmem:[%s2] sm:$0x1]
  %v158 = vperm.slane %v156, 0
  %v160 = vmul.f32 %v117, %v158
  %v161 = vmul.f32 %v119, %v158
  %v162 = vmul.f32 %v122, %v158
  %v163 = vmul.f32 %v124, %v158
  %v164 = vmul.f32 %v127, %v158
  %v165 = vmul.f32 %v129, %v158
  %v166 = vmul.f32 %v132, %v158
  %v167 = vmul.f32 %v134, %v158
  %v168 = vmul.f32 %v137, %v158
  %v169 = vmul.f32 %v139, %v158
  %v170 = vmul.f32 %v142, %v158
  %v171 = vmul.f32 %v144, %v158
  %v172 = vmul.f32 %v147, %v158
  %v173 = vmul.f32 %v149, %v158
  %v174 = vmul.f32 %v152, %v158
  %v175 = vmul.f32 %v154, %v158
  %v176 = vld [vmem:[%s3] sm:$0x1]
  %v178 = vperm.slane %v176, 0
  %v180 = vadd.f32 %v160, %v178
  %v181 = vadd.f32 %v161, %v178
  %v182 = vadd.f32 %v162, %v178
  %v183 = vadd.f32 %v163, %v178
  %v184 = vadd.f32 %v164, %v178
  %v185 = vadd.f32 %v165, %v178
  %v186 = vadd.f32 %v166, %v178
  %v187 = vadd.f32 %v167, %v178
  %v188 = vadd.f32 %v168, %v178
  %v189 = vadd.f32 %v169, %v178
  %v190 = vadd.f32 %v170, %v178
  %v191 = vadd.f32 %v171, %v178
  %v192 = vadd.f32 %v172, %v178
  %v193 = vadd.f32 %v173, %v178
  %v194 = vadd.f32 %v174, %v178
  %v195 = vadd.f32 %v175, %v178
  %v196 = vpack.c.bf16 %v180, %v180
  %v197 = vpack.c.bf16 %v181, %v181
  %v198 = vpack.c.bf16 %v182, %v182
  %v199 = vpack.c.bf16 %v183, %v183
  %v200 = vpack.c.bf16 %v184, %v184
  %v201 = vpack.c.bf16 %v185, %v185
  %v202 = vpack.c.bf16 %v186, %v186
  %v203 = vpack.c.bf16 %v187, %v187
  %v204 = vpack.c.bf16 %v188, %v188
  %v205 = vpack.c.bf16 %v189, %v189
  %v206 = vpack.c.bf16 %v190, %v190
  %v207 = vpack.c.bf16 %v191, %v191
  %v208 = vpack.c.bf16 %v192, %v192
  %v209 = vpack.c.bf16 %v193, %v193
  %v210 = vpack.c.bf16 %v194, %v194
  %v211 = vpack.c.bf16 %v195, %v195
  %212 = vst [vmem:[%s4] sm:$0xf] %v196
  %213 = vst [vmem:[%s4 + $0x4] sm:$0xf] %v197
  %214 = vst [vmem:[%s4 + $0x8] sm:$0xf] %v198
  %215 = vst [vmem:[%s4 + $0xc] sm:$0xf] %v199
  %216 = vst [vmem:[%s4 + $0x10] sm:$0xf] %v200
  %217 = vst [vmem:[%s4 + $0x14] sm:$0xf] %v201
  %218 = vst [vmem:[%s4 + $0x18] sm:$0xf] %v202
  %219 = vst [vmem:[%s4 + $0x1c] sm:$0xf] %v203
  %220 = vst [vmem:[%s4 + $0x20] sm:$0xf] %v204
  %221 = vst [vmem:[%s4 + $0x24] sm:$0xf] %v205
  %222 = vst [vmem:[%s4 + $0x28] sm:$0xf] %v206
  %223 = vst [vmem:[%s4 + $0x2c] sm:$0xf] %v207
  %224 = vst [vmem:[%s4 + $0x30] sm:$0xf] %v208
  %225 = vst [vmem:[%s4 + $0x34] sm:$0xf] %v209
  %226 = vst [vmem:[%s4 + $0x38] sm:$0xf] %v210
  %227 = vst [vmem:[%s4 + $0x3c] sm:$0xf] %v211
  // Predicated region
  $region18: #{bottleneck_forward.4} parent=0 // pred_check
    _
  $region19: #{bottleneck_forward.4} parent=0 // pred_check_branch
    %229 = sbr.rel (0) target = $region21
  $region20: #{bottleneck_forward.4} parent=0 // pred_region
    _
  $region21: #{bottleneck_forward.4} parent=0 // pred_fallthru
    _
  // Predicated region
  $region22: #{bottleneck_forward.4} parent=0 // pred_check
    _
  $region23: #{bottleneck_forward.4} parent=0 // pred_check_branch
    %231 = sbr.rel (0) target = $region25
  $region24: #{bottleneck_forward.4} parent=0 // pred_region
    _
  $region25: #{bottleneck_forward.4} parent=0 // pred_fallthru
    _

// kernel: bottleneck_forward.5
$region0: #{bottleneck_forward.5}
  #allocation0 [shape = 'u32[]', space=smem, size = 0x4, offset = 0x4, fixed_abs, tag = 'smem constant byte address 0x4 - core index']
  #allocation1 [shape = 'u32[72,128]{1,0:T(1,128)}', space=vmem, size = 0x9000, scoped, tag = 'internal scratch']
  %s0 = inlined_call_operand.vmem [shape: bf16[128,128], index: 0, kind: input, shape index: {}]
  %s1 = inlined_call_operand.vmem [shape: bf16[128,128], index: 1, kind: input, shape index: {}]
  %s2 = inlined_call_operand.vmem [shape: f32[1,128], index: 2, kind: input, shape index: {}]
  %s3 = inlined_call_operand.vmem [shape: f32[1,128], index: 3, kind: input, shape index: {}]
  %s4 = inlined_call_operand.vmem [shape: bf16[128,128], index: 4, kind: input, shape index: {}]
  %s5 = inlined_call_operand.hbm [shape: bf16[128,128], index: 5, kind: output, shape index: {}]
  %s6 = sld [smem:[#allocation0]]
  $region30: #{bottleneck_forward.5} parent=0
    _
  %s8 = ssub.s32 1, %s6
  %s9 = scalar_select 0, %s8, %s6
  $region1: #{bottleneck_forward.5} parent=0
    #allocation2 [shape = 'u8[32768]{0}', space=vmem, size = 0x8000, scoped, tag = 'output window, operand 0, single buffered']
    #allocation3 [shape = 's32[1]{0}', space=sflag, size = 0x4, scoped, tag = 'scoped memory for bottleneck_forward.5']
    %10 = vsyncpa [#allocation3], 0
    // Predicated region
    $region2: #{bottleneck_forward.5} parent=1 // pred_check
      _
    $region3: #{bottleneck_forward.5} parent=1 // pred_check_branch
      %12 = sbr.rel (0) target = $region5
    $region4: #{bottleneck_forward.5} parent=1 // pred_region
      _
    $region5: #{bottleneck_forward.5} parent=1 // pred_fallthru
      _
    // Predicated region
    $region6: #{bottleneck_forward.5} parent=1 // pred_check
      _
    $region7: #{bottleneck_forward.5} parent=1 // pred_check_branch
      %14 = sbr.rel (0) target = $region9
    $region8: #{bottleneck_forward.5} parent=1 // pred_region
      _
    $region9: #{bottleneck_forward.5} parent=1 // pred_fallthru
      _
    // Predicated region
    $region10: #{bottleneck_forward.5} parent=1 // pred_check
      _
    $region11: #{bottleneck_forward.5} parent=1 // pred_check_branch
      %16 = sbr.rel (0) target = $region13
    $region12: #{bottleneck_forward.5} parent=1 // pred_region
      _
    $region13: #{bottleneck_forward.5} parent=1 // pred_fallthru
      _
    // Predicated region
    $region14: #{bottleneck_forward.5} parent=1 // pred_check
      _
    $region15: #{bottleneck_forward.5} parent=1 // pred_check_branch
      %18 = sbr.rel (0) target = $region17
    $region16: #{bottleneck_forward.5} parent=1 // pred_region
      _
    $region17: #{bottleneck_forward.5} parent=1 // pred_fallthru
      _
    // Predicated region
    $region18: #{bottleneck_forward.5} parent=1 // pred_check
      _
    $region19: #{bottleneck_forward.5} parent=1 // pred_check_branch
      %20 = sbr.rel (0) target = $region21
    $region20: #{bottleneck_forward.5} parent=1 // pred_region
      _
    $region21: #{bottleneck_forward.5} parent=1 // pred_fallthru
      _
    %v21 = vld [vmem:[%s0] sm:$0xf]
    %v22 = vld [vmem:[%s0 + $0x4] sm:$0xf]
    %v23 = vld [vmem:[%s0 + $0x8] sm:$0xf]
    %v24 = vld [vmem:[%s0 + $0xc] sm:$0xf]
    %v25 = vld [vmem:[%s0 + $0x10] sm:$0xf]
    %v26 = vld [vmem:[%s0 + $0x14] sm:$0xf]
    %v27 = vld [vmem:[%s0 + $0x18] sm:$0xf]
    %v28 = vld [vmem:[%s0 + $0x1c] sm:$0xf]
    %v29 = vld [vmem:[%s0 + $0x20] sm:$0xf]
    %v30 = vld [vmem:[%s0 + $0x24] sm:$0xf]
    %v31 = vld [vmem:[%s0 + $0x28] sm:$0xf]
    %v32 = vld [vmem:[%s0 + $0x2c] sm:$0xf]
    %v33 = vld [vmem:[%s0 + $0x30] sm:$0xf]
    %v34 = vld [vmem:[%s0 + $0x34] sm:$0xf]
    %v35 = vld [vmem:[%s0 + $0x38] sm:$0xf]
    %v36 = vld [vmem:[%s0 + $0x3c] sm:$0xf]
    %v37 = vld [vmem:[%s1] sm:$0xf]
    %v38 = vld [vmem:[%s1 + $0x4] sm:$0xf]
    %v39 = vld [vmem:[%s1 + $0x8] sm:$0xf]
    %v40 = vld [vmem:[%s1 + $0xc] sm:$0xf]
    %v41 = vld [vmem:[%s1 + $0x10] sm:$0xf]
    %v42 = vld [vmem:[%s1 + $0x14] sm:$0xf]
    %v43 = vld [vmem:[%s1 + $0x18] sm:$0xf]
    %v44 = vld [vmem:[%s1 + $0x1c] sm:$0xf]
    %v45 = vld [vmem:[%s1 + $0x20] sm:$0xf]
    %v46 = vld [vmem:[%s1 + $0x24] sm:$0xf]
    %v47 = vld [vmem:[%s1 + $0x28] sm:$0xf]
    %v48 = vld [vmem:[%s1 + $0x2c] sm:$0xf]
    %v49 = vld [vmem:[%s1 + $0x30] sm:$0xf]
    %v50 = vld [vmem:[%s1 + $0x34] sm:$0xf]
    %v51 = vld [vmem:[%s1 + $0x38] sm:$0xf]
    %v52 = vld [vmem:[%s1 + $0x3c] sm:$0xf]
    %v69 = vunpack.c.l.b16 %v21
    %v70 = vunpack.c.l.b16 %v22
    %v71 = vunpack.c.l.b16 %v23
    %v72 = vunpack.c.l.b16 %v24
    %v73 = vunpack.c.l.b16 %v25
    %v74 = vunpack.c.l.b16 %v26
    %v75 = vunpack.c.l.b16 %v27
    %v76 = vunpack.c.l.b16 %v28
    %v77 = vunpack.c.l.b16 %v29
    %v78 = vunpack.c.l.b16 %v30
    %v79 = vunpack.c.l.b16 %v31
    %v80 = vunpack.c.l.b16 %v32
    %v81 = vunpack.c.l.b16 %v33
    %v82 = vunpack.c.l.b16 %v34
    %v83 = vunpack.c.l.b16 %v35
    %v84 = vunpack.c.l.b16 %v36
    %v85 = vpack.c.b16 %v70, %v69
    %v86 = vpack.c.b16 %v72, %v71
    %v87 = vpack.c.b16 %v74, %v73
    %v88 = vpack.c.b16 %v76, %v75
    %v89 = vpack.c.b16 %v78, %v77
    %v90 = vpack.c.b16 %v80, %v79
    %v91 = vpack.c.b16 %v82, %v81
    %v92 = vpack.c.b16 %v84, %v83
    %v117 = vunpack.c.l.b16 %v37
    %v118 = vunpack.c.l.b16 %v38
    %v119 = vunpack.c.l.b16 %v39
    %v120 = vunpack.c.l.b16 %v40
    %v121 = vunpack.c.l.b16 %v41
    %v122 = vunpack.c.l.b16 %v42
    %v123 = vunpack.c.l.b16 %v43
    %v124 = vunpack.c.l.b16 %v44
    %v125 = vunpack.c.l.b16 %v45
    %v126 = vunpack.c.l.b16 %v46
    %v127 = vunpack.c.l.b16 %v47
    %v128 = vunpack.c.l.b16 %v48
    %v129 = vunpack.c.l.b16 %v49
    %v130 = vunpack.c.l.b16 %v50
    %v131 = vunpack.c.l.b16 %v51
    %v132 = vunpack.c.l.b16 %v52
    %v133 = vpack.c.b16 %v118, %v117
    %v134 = vpack.c.b16 %v120, %v119
    %v135 = vpack.c.b16 %v122, %v121
    %v136 = vpack.c.b16 %v124, %v123
    %v137 = vpack.c.b16 %v126, %v125
    %v138 = vpack.c.b16 %v128, %v127
    %v139 = vpack.c.b16 %v130, %v129
    %v140 = vpack.c.b16 %v132, %v131
    %149 = vmatpush.bf16.msra.mxu0 %v140
    %150 = vmatpush.bf16.msra.mxu0 %v139
    %151 = vmatpush.bf16.msra.mxu0 %v138
    %152 = vmatpush.bf16.msra.mxu0 %v137
    %153 = vmatpush.bf16.msra.mxu0 %v136
    %154 = vmatpush.bf16.msra.mxu0 %v135
    %155 = vmatpush.bf16.msra.mxu0 %v134
    %156 = vmatpush.bf16.msra.mxu0 %v133
    %157 = vmatmul.bf16.gmra.mxu0 %v85
    %v158 = vpop.f32.mrf.mxu0
    %v159 = vadd.f32 0.0, %v158
    %v160 = vpop.f32.mrf.mxu0
    %v161 = vadd.f32 0.0, %v160
    %162 = vmatmul.bf16.gmra.mxu0 %v86
    %v163 = vpop.f32.mrf.mxu0
    %v164 = vadd.f32 0.0, %v163
    %v165 = vpop.f32.mrf.mxu0
    %v166 = vadd.f32 0.0, %v165
    %167 = vmatmul.bf16.gmra.mxu0 %v87
    %v168 = vpop.f32.mrf.mxu0
    %v169 = vadd.f32 0.0, %v168
    %v170 = vpop.f32.mrf.mxu0
    %v171 = vadd.f32 0.0, %v170
    %172 = vmatmul.bf16.gmra.mxu0 %v88
    %v173 = vpop.f32.mrf.mxu0
    %v174 = vadd.f32 0.0, %v173
    %v175 = vpop.f32.mrf.mxu0
    %v176 = vadd.f32 0.0, %v175
    %177 = vmatmul.bf16.gmra.mxu0 %v89
    %v178 = vpop.f32.mrf.mxu0
    %v179 = vadd.f32 0.0, %v178
    %v180 = vpop.f32.mrf.mxu0
    %v181 = vadd.f32 0.0, %v180
    %182 = vmatmul.bf16.gmra.mxu0 %v90
    %v183 = vpop.f32.mrf.mxu0
    %v184 = vadd.f32 0.0, %v183
    %v185 = vpop.f32.mrf.mxu0
    %v186 = vadd.f32 0.0, %v185
    %187 = vmatmul.bf16.gmra.mxu0 %v91
    %v188 = vpop.f32.mrf.mxu0
    %v189 = vadd.f32 0.0, %v188
    %v190 = vpop.f32.mrf.mxu0
    %v191 = vadd.f32 0.0, %v190
    %192 = vmatmul.bf16.gmra.mxu0 %v92
    %v193 = vpop.f32.mrf.mxu0
    %v194 = vadd.f32 0.0, %v193
    %v195 = vpop.f32.mrf.mxu0
    %v196 = vadd.f32 0.0, %v195
    %197 = vdwg.mxu0
    %v198 = vld [vmem:[%s2] sm:$0x1]
    %v200 = vperm.slane %v198, 0
    %v202 = vmul.f32 %v159, %v200
    %v203 = vmul.f32 %v161, %v200
    %v204 = vmul.f32 %v164, %v200
    %v205 = vmul.f32 %v166, %v200
    %v206 = vmul.f32 %v169, %v200
    %v207 = vmul.f32 %v171, %v200
    %v208 = vmul.f32 %v174, %v200
    %v209 = vmul.f32 %v176, %v200
    %v210 = vmul.f32 %v179, %v200
    %v211 = vmul.f32 %v181, %v200
    %v212 = vmul.f32 %v184, %v200
    %v213 = vmul.f32 %v186, %v200
    %v214 = vmul.f32 %v189, %v200
    %v215 = vmul.f32 %v191, %v200
    %v216 = vmul.f32 %v194, %v200
    %v217 = vmul.f32 %v196, %v200
    %v218 = vld [vmem:[%s3] sm:$0x1]
    %v220 = vperm.slane %v218, 0
    %v222 = vadd.f32 %v202, %v220
    %v223 = vadd.f32 %v203, %v220
    %v224 = vadd.f32 %v204, %v220
    %v225 = vadd.f32 %v205, %v220
    %v226 = vadd.f32 %v206, %v220
    %v227 = vadd.f32 %v207, %v220
    %v228 = vadd.f32 %v208, %v220
    %v229 = vadd.f32 %v209, %v220
    %v230 = vadd.f32 %v210, %v220
    %v231 = vadd.f32 %v211, %v220
    %v232 = vadd.f32 %v212, %v220
    %v233 = vadd.f32 %v213, %v220
    %v234 = vadd.f32 %v214, %v220
    %v235 = vadd.f32 %v215, %v220
    %v236 = vadd.f32 %v216, %v220
    %v237 = vadd.f32 %v217, %v220
    %v238 = vld [vmem:[%s4] sm:$0xf]
    %v239 = vld [vmem:[%s4 + $0x4] sm:$0xf]
    %v240 = vld [vmem:[%s4 + $0x8] sm:$0xf]
    %v241 = vld [vmem:[%s4 + $0xc] sm:$0xf]
    %v242 = vld [vmem:[%s4 + $0x10] sm:$0xf]
    %v243 = vld [vmem:[%s4 + $0x14] sm:$0xf]
    %v244 = vld [vmem:[%s4 + $0x18] sm:$0xf]
    %v245 = vld [vmem:[%s4 + $0x1c] sm:$0xf]
    %v246 = vld [vmem:[%s4 + $0x20] sm:$0xf]
    %v247 = vld [vmem:[%s4 + $0x24] sm:$0xf]
    %v248 = vld [vmem:[%s4 + $0x28] sm:$0xf]
    %v249 = vld [vmem:[%s4 + $0x2c] sm:$0xf]
    %v250 = vld [vmem:[%s4 + $0x30] sm:$0xf]
    %v251 = vld [vmem:[%s4 + $0x34] sm:$0xf]
    %v252 = vld [vmem:[%s4 + $0x38] sm:$0xf]
    %v253 = vld [vmem:[%s4 + $0x3c] sm:$0xf]
    %v254 = vunpack.c.l.bf16 %v238
    %v255 = vunpack.c.l.bf16 %v239
    %v256 = vunpack.c.l.bf16 %v240
    %v257 = vunpack.c.l.bf16 %v241
    %v258 = vunpack.c.l.bf16 %v242
    %v259 = vunpack.c.l.bf16 %v243
    %v260 = vunpack.c.l.bf16 %v244
    %v261 = vunpack.c.l.bf16 %v245
    %v262 = vunpack.c.l.bf16 %v246
    %v263 = vunpack.c.l.bf16 %v247
    %v264 = vunpack.c.l.bf16 %v248
    %v265 = vunpack.c.l.bf16 %v249
    %v266 = vunpack.c.l.bf16 %v250
    %v267 = vunpack.c.l.bf16 %v251
    %v268 = vunpack.c.l.bf16 %v252
    %v269 = vunpack.c.l.bf16 %v253
    %v270 = vadd.f32 %v222, %v254
    %v271 = vadd.f32 %v223, %v255
    %v272 = vadd.f32 %v224, %v256
    %v273 = vadd.f32 %v225, %v257
    %v274 = vadd.f32 %v226, %v258
    %v275 = vadd.f32 %v227, %v259
    %v276 = vadd.f32 %v228, %v260
    %v277 = vadd.f32 %v229, %v261
    %v278 = vadd.f32 %v230, %v262
    %v279 = vadd.f32 %v231, %v263
    %v280 = vadd.f32 %v232, %v264
    %v281 = vadd.f32 %v233, %v265
    %v282 = vadd.f32 %v234, %v266
    %v283 = vadd.f32 %v235, %v267
    %v284 = vadd.f32 %v236, %v268
    %v285 = vadd.f32 %v237, %v269
    %v286 = vmax.f32 %v270, 0.0
    %v287 = vmax.f32 %v271, 0.0
    %v288 = vmax.f32 %v272, 0.0
    %v289 = vmax.f32 %v273, 0.0
    %v290 = vmax.f32 %v274, 0.0
    %v291 = vmax.f32 %v275, 0.0
    %v292 = vmax.f32 %v276, 0.0
    %v293 = vmax.f32 %v277, 0.0
    %v294 = vmax.f32 %v278, 0.0
    %v295 = vmax.f32 %v279, 0.0
    %v296 = vmax.f32 %v280, 0.0
    %v297 = vmax.f32 %v281, 0.0
    %v298 = vmax.f32 %v282, 0.0
    %v299 = vmax.f32 %v283, 0.0
    %v300 = vmax.f32 %v284, 0.0
    %v301 = vmax.f32 %v285, 0.0
    %v302 = vpack.c.bf16 %v286, %v286
    %v303 = vpack.c.bf16 %v287, %v287
    %v304 = vpack.c.bf16 %v288, %v288
    %v305 = vpack.c.bf16 %v289, %v289
    %v306 = vpack.c.bf16 %v290, %v290
    %v307 = vpack.c.bf16 %v291, %v291
    %v308 = vpack.c.bf16 %v292, %v292
    %v309 = vpack.c.bf16 %v293, %v293
    %v310 = vpack.c.bf16 %v294, %v294
    %v311 = vpack.c.bf16 %v295, %v295
    %v312 = vpack.c.bf16 %v296, %v296
    %v313 = vpack.c.bf16 %v297, %v297
    %v314 = vpack.c.bf16 %v298, %v298
    %v315 = vpack.c.bf16 %v299, %v299
    %v316 = vpack.c.bf16 %v300, %v300
    %v317 = vpack.c.bf16 %v301, %v301
    %318 = vst [vmem:[#allocation2] sm:$0xf] %v302
    %319 = vst [vmem:[#allocation2 + $0x4] sm:$0xf] %v303
    %320 = vst [vmem:[#allocation2 + $0x8] sm:$0xf] %v304
    %321 = vst [vmem:[#allocation2 + $0xc] sm:$0xf] %v305
    %322 = vst [vmem:[#allocation2 + $0x10] sm:$0xf] %v306
    %323 = vst [vmem:[#allocation2 + $0x14] sm:$0xf] %v307
    %324 = vst [vmem:[#allocation2 + $0x18] sm:$0xf] %v308
    %325 = vst [vmem:[#allocation2 + $0x1c] sm:$0xf] %v309
    %326 = vst [vmem:[#allocation2 + $0x20] sm:$0xf] %v310
    %327 = vst [vmem:[#allocation2 + $0x24] sm:$0xf] %v311
    %328 = vst [vmem:[#allocation2 + $0x28] sm:$0xf] %v312
    %329 = vst [vmem:[#allocation2 + $0x2c] sm:$0xf] %v313
    %330 = vst [vmem:[#allocation2 + $0x30] sm:$0xf] %v314
    %331 = vst [vmem:[#allocation2 + $0x34] sm:$0xf] %v315
    %332 = vst [vmem:[#allocation2 + $0x38] sm:$0xf] %v316
    %333 = vst [vmem:[#allocation2 + $0x3c] sm:$0xf] %v317
    // Predicated region
    $region22: #{bottleneck_forward.5} parent=1 // pred_check
      _
    $region23: #{bottleneck_forward.5} parent=1 // pred_check_branch
      %335 = sbr.rel (0) target = $region25
    $region24: #{bottleneck_forward.5} parent=1 // pred_region
      %337 = vsyncadd [#allocation3], 0
      %s338 = sshll.u32 [#allocation2], 4
      %s339 = int_to_ptr.vmem [resolvable:$true] %s338
      %s340 = sshll.u32 %s5, 4
      %s341 = int_to_ptr.hbm [resolvable:$true] %s340
      %346 = dma.vmem_to_hbm [thread:$0]  %s339, 1024, %s341, [#allocation3], 64, 64, 4
    $region25: #{bottleneck_forward.5} parent=1 // pred_fallthru
      _
    // Predicated region
    $region26: #{bottleneck_forward.5} parent=1 // pred_check
      _
    $region27: #{bottleneck_forward.5} parent=1 // pred_check_branch
      %348 = sbr.rel (0) target = $region29
    $region28: #{bottleneck_forward.5} parent=1 // pred_region
      %350 = dma.done [#allocation3], 1024
    $region29: #{bottleneck_forward.5} parent=1 // pred_fallthru
      _
    %351 = vsyncpa [#allocation3], 1

// kernel: bottleneck_forward.3
$region0: #{bottleneck_forward.3}
  #allocation0 [shape = 'u32[]', space=smem, size = 0x4, offset = 0x4, fixed_abs, tag = 'smem constant byte address 0x4 - core index']
  #allocation1 [shape = 'u32[72,128]{1,0:T(1,128)}', space=vmem, size = 0x9000, scoped, tag = 'internal scratch']
  #allocation2 [shape = 'bf16[10,10,128]{2,1,0:T(8,128)(2,1)}', space=vmem, size = 0xa000, scoped, tag = 'scratch operand']
  %s0 = inlined_call_operand.vmem [shape: bf16[2,8,8,16], index: 0, kind: input, shape index: {}]
  %s1 = inlined_call_operand.vmem [shape: bf16[16,128], index: 1, kind: input, shape index: {}]
  %s2 = inlined_call_operand.vmem [shape: f32[1,128], index: 2, kind: input, shape index: {}]
  %s3 = inlined_call_operand.vmem [shape: f32[1,128], index: 3, kind: input, shape index: {}]
  %s4 = inlined_call_operand.hbm [shape: bf16[3,3,128,128], index: 4, kind: input, shape index: {}]
  %s5 = inlined_call_operand.vmem [shape: f32[1,128], index: 5, kind: input, shape index: {}]
  %s6 = inlined_call_operand.vmem [shape: f32[1,128], index: 6, kind: input, shape index: {}]
  %s7 = inlined_call_operand.vmem [shape: bf16[2,8,8,128], index: 7, kind: output, shape index: {}]
  %s8 = sld [smem:[#allocation0]]
  $region69: #{bottleneck_forward.3} parent=0
    _
  %s10 = ssub.s32 1, %s8
  %s11 = scalar_select 0, %s10, %s8
  $region1: #{bottleneck_forward.3} parent=0
    #allocation3 [shape = 'u8[294912]{0}', space=vmem, size = 0x48000, scoped, tag = 'input window, operand 4, single buffered']
    #allocation4 [shape = 's32[2]{0}', space=sflag, size = 0x8, scoped, tag = 'scoped memory for bottleneck_forward.3']
    %12 = vsyncpa [#allocation4], 0
    loop: start=0, step=1, limit=4
    $region2: #{bottleneck_forward.3} parent=1 // loop_pre_header
      _
    $region3: #{bottleneck_forward.3} parent=1 // loop_header
      %s14 = sphi 0, %s18
      %p15 = scmp.ge.s32.totalorder %s14, 4
      %s21 = sphi 0, %s33
      %s22 = sphi 0, %s29
      %s23 = sphi 0, %s21
      %s24 = sphi 0, %s22
      %s25 = sphi 0, %s23
      %s26 = sphi 0, %s24
      %s36 = sphi 0, %s38
      %s39 = sphi 0, %s36
      %s40 = sphi 0, %s39
      %s56 = sphi 0, %s40
      %s60 = sphi 0, %s60
      %s62 = sphi 0, %s60
      %s63 = sphi 0, %s62
      %s77 = sphi 0, %s63
      %s81 = sphi 0, %s81
      %s83 = sphi 0, %s81
      %s84 = sphi 0, %s83
      %s98 = sphi 0, %s84
      %s102 = sphi 0, %s102
      %s104 = sphi 0, %s102
      %s105 = sphi 0, %s104
      %s119 = sphi 0, %s105
      %s123 = sphi 0, %s123
      %s125 = sphi 0, %s123
      %s126 = sphi 0, %s125
      %s140 = sphi 0, %s126
      %s144 = sphi 0, %s144
      %s146 = sphi 0, %s144
      %s147 = sphi 0, %s146
      %s161 = sphi 0, %s147
      %s165 = sphi 0, %s165
      %s167 = sphi 0, %s165
      %s168 = sphi 0, %s167
      %s182 = sphi 0, %s168
      %s190 = sphi 0, %s192
      %s193 = sphi 0, %s190
      %s194 = sphi 0, %s193
      %s210 = sphi 0, %s194
    $region4: #{bottleneck_forward.3} parent=1 // loop_header_branch
      %17 = sbr.rel (%p15) target = $region8
    $region5: #{bottleneck_forward.3} parent=1 // loop_body
      %s19 = ssub.s32 %s14, 1
      %s20 = ssub.s32 %s14, 2
      %s27 = sadd.s32 1, %s22
      %p28 = scmp.ge.s32.totalorder %s27, 1
      %s29 = scalar_select %p28, 0, %s27
      %s30 = sadd.s32 1, %s21
      %s31 = scalar_select %p28, %s30, %s21
      %p32 = scmp.ge.s32.totalorder %s31, 2
      %s33 = scalar_select %p32, 0, %s31
      %s34 = ssub.s32 %s21, %s33
      %p35 = scmp.eq.s32.totalorder %s34, 0
      %s37 = sadd.s32 %s36, 1
      %s38 = scalar_select %p35, %s36, %s37
      %p41 = pneg %p35
      %p42 = scmp.eq.s32.totalorder %s14, 1
      %p43 = por %p41, %p42
      %p44 = scmp.ne.s32.totalorder %s36, %s39
      %p45 = scmp.eq.s32.totalorder %s14, 0
      %p46 = por %p44, %p45
      %p47 = scmp.ne.s32.totalorder %s36, %s39
      %p48 = scmp.eq.s32.totalorder %s19, 1
      %p49 = por %p47, %p48
      %p50 = scmp.ne.s32.totalorder %s39, %s40
      %p51 = scmp.eq.s32.totalorder %s19, 0
      %p52 = por %p50, %p51
      %p53 = scmp.ne.s32.totalorder %s39, %s40
      %p54 = scmp.eq.s32.totalorder %s20, 1
      %p55 = por %p53, %p54
      %p57 = scmp.ne.s32.totalorder %s40, %s56
      %p58 = scmp.eq.s32.totalorder %s20, 0
      %p59 = por %p57, %p58
      %s61 = sadd.s32 %s60, 1
      %p64 = scmp.eq.s32.totalorder %s14, 1
      %p65 = scmp.ne.s32.totalorder %s60, %s62
      %p66 = scmp.eq.s32.totalorder %s14, 0
      %p67 = por %p65, %p66
      %p68 = scmp.ne.s32.totalorder %s60, %s62
      %p69 = scmp.eq.s32.totalorder %s19, 1
      %p70 = por %p68, %p69
      %p71 = scmp.ne.s32.totalorder %s62, %s63
      %p72 = scmp.eq.s32.totalorder %s19, 0
      %p73 = por %p71, %p72
      %p74 = scmp.ne.s32.totalorder %s62, %s63
      %p75 = scmp.eq.s32.totalorder %s20, 1
      %p76 = por %p74, %p75
      %p78 = scmp.ne.s32.totalorder %s63, %s77
      %p79 = scmp.eq.s32.totalorder %s20, 0
      %p80 = por %p78, %p79
      %s82 = sadd.s32 %s81, 1
      %p85 = scmp.eq.s32.totalorder %s14, 1
      %p86 = scmp.ne.s32.totalorder %s81, %s83
      %p87 = scmp.eq.s32.totalorder %s14, 0
      %p88 = por %p86, %p87
      %p89 = scmp.ne.s32.totalorder %s81, %s83
      %p90 = scmp.eq.s32.totalorder %s19, 1
      %p91 = por %p89, %p90
      %p92 = scmp.ne.s32.totalorder %s83, %s84
      %p93 = scmp.eq.s32.totalorder %s19, 0
      %p94 = por %p92, %p93
      %p95 = scmp.ne.s32.totalorder %s83, %s84
      %p96 = scmp.eq.s32.totalorder %s20, 1
      %p97 = por %p95, %p96
      %p99 = scmp.ne.s32.totalorder %s84, %s98
      %p100 = scmp.eq.s32.totalorder %s20, 0
      %p101 = por %p99, %p100
      %s103 = sadd.s32 %s102, 1
      %p106 = scmp.eq.s32.totalorder %s14, 1
      %p107 = scmp.ne.s32.totalorder %s102, %s104
      %p108 = scmp.eq.s32.totalorder %s14, 0
      %p109 = por %p107, %p108
      %p110 = scmp.ne.s32.totalorder %s102, %s104
      %p111 = scmp.eq.s32.totalorder %s19, 1
      %p112 = por %p110, %p111
      %p113 = scmp.ne.s32.totalorder %s104, %s105
      %p114 = scmp.eq.s32.totalorder %s19, 0
      %p115 = por %p113, %p114
      %p116 = scmp.ne.s32.totalorder %s104, %s105
      %p117 = scmp.eq.s32.totalorder %s20, 1
      %p118 = por %p116, %p117
      %p120 = scmp.ne.s32.totalorder %s105, %s119
      %p121 = scmp.eq.s32.totalorder %s20, 0
      %p122 = por %p120, %p121
      %s124 = sadd.s32 %s123, 1
      %p127 = scmp.eq.s32.totalorder %s14, 1
      %p128 = scmp.ne.s32.totalorder %s123, %s125
      %p129 = scmp.eq.s32.totalorder %s14, 0
      %p130 = por %p128, %p129
      %p131 = scmp.ne.s32.totalorder %s123, %s125
      %p132 = scmp.eq.s32.totalorder %s19, 1
      %p133 = por %p131, %p132
      %p134 = scmp.ne.s32.totalorder %s125, %s126
      %p135 = scmp.eq.s32.totalorder %s19, 0
      %p136 = por %p134, %p135
      %p137 = scmp.ne.s32.totalorder %s125, %s126
      %p138 = scmp.eq.s32.totalorder %s20, 1
      %p139 = por %p137, %p138
      %p141 = scmp.ne.s32.totalorder %s126, %s140
      %p142 = scmp.eq.s32.totalorder %s20, 0
      %p143 = por %p141, %p142
      %s145 = sadd.s32 %s144, 1
      %p148 = scmp.eq.s32.totalorder %s14, 1
      %p149 = scmp.ne.s32.totalorder %s144, %s146
      %p150 = scmp.eq.s32.totalorder %s14, 0
      %p151 = por %p149, %p150
      %p152 = scmp.ne.s32.totalorder %s144, %s146
      %p153 = scmp.eq.s32.totalorder %s19, 1
      %p154 = por %p152, %p153
      %p155 = scmp.ne.s32.totalorder %s146, %s147
      %p156 = scmp.eq.s32.totalorder %s19, 0
      %p157 = por %p155, %p156
      %p158 = scmp.ne.s32.totalorder %s146, %s147
      %p159 = scmp.eq.s32.totalorder %s20, 1
      %p160 = por %p158, %p159
      %p162 = scmp.ne.s32.totalorder %s147, %s161
      %p163 = scmp.eq.s32.totalorder %s20, 0
      %p164 = por %p162, %p163
      %s166 = sadd.s32 %s165, 1
      %p169 = scmp.eq.s32.totalorder %s14, 1
      %p170 = scmp.ne.s32.totalorder %s165, %s167
      %p171 = scmp.eq.s32.totalorder %s14, 0
      %p172 = por %p170, %p171
      %p173 = scmp.ne.s32.totalorder %s165, %s167
      %p174 = scmp.eq.s32.totalorder %s19, 1
      %p175 = por %p173, %p174
      %p176 = scmp.ne.s32.totalorder %s167, %s168
      %p177 = scmp.eq.s32.totalorder %s19, 0
      %p178 = por %p176, %p177
      %p179 = scmp.ne.s32.totalorder %s167, %s168
      %p180 = scmp.eq.s32.totalorder %s20, 1
      %p181 = por %p179, %p180
      %p183 = scmp.ne.s32.totalorder %s168, %s182
      %p184 = scmp.eq.s32.totalorder %s20, 0
      %p185 = por %p183, %p184
      %s186 = ssub.s32 %s21, %s33
      %s187 = ssub.s32 %s22, %s29
      %s188 = sor.u32 %s186, %s187
      %p189 = scmp.eq.s32.totalorder %s188, 0
      %s191 = sadd.s32 %s190, 1
      %s192 = scalar_select %p189, %s190, %s191
      %p195 = pneg %p189
      %p196 = scmp.eq.s32.totalorder %s14, 1
      %p197 = por %p195, %p196
      %p198 = scmp.ne.s32.totalorder %s190, %s193
      %p199 = scmp.eq.s32.totalorder %s14, 0
      %p200 = por %p198, %p199
      %p201 = scmp.ne.s32.totalorder %s190, %s193
      %p202 = scmp.eq.s32.totalorder %s19, 1
      %p203 = por %p201, %p202
      %p204 = scmp.ne.s32.totalorder %s193, %s194
      %p205 = scmp.eq.s32.totalorder %s19, 0
      %p206 = por %p204, %p205
      %p207 = scmp.ne.s32.totalorder %s193, %s194
      %p208 = scmp.eq.s32.totalorder %s20, 1
      %p209 = por %p207, %p208
      %p211 = scmp.ne.s32.totalorder %s194, %s210
      %p212 = scmp.eq.s32.totalorder %s20, 0
      %p213 = por %p211, %p212
      %p214 = scmp.le.s32.totalorder 1, %s14
      %p215 = scmp.lt.s32.totalorder %s14, 3
      %p216 = pnand %p214, %p215
      %p217 = pneg %p216
      // Predicated region
      $region9: #{bottleneck_forward.3} parent=5 // pred_check
        _
      $region10: #{bottleneck_forward.3} parent=5 // pred_check_branch
        %219 = sbr.rel (%p216) target = $region12
      $region11: #{bottleneck_forward.3} parent=5 // pred_region
        %s220 = ssub.s32 %s14, 1
        // Predicated region
        $region13: #{bottleneck_forward.3} parent=11 // pred_check
          %p221 = pneg %p73
        $region14: #{bottleneck_forward.3} parent=11 // pred_check_branch
          %223 = sbr.rel (%p221) target = $region16
        $region15: #{bottleneck_forward.3} parent=11 // pred_region
          _
        $region16: #{bottleneck_forward.3} parent=11 // pred_fallthru
          _
        // Predicated region
        $region17: #{bottleneck_forward.3} parent=11 // pred_check
          %p224 = pneg %p94
        $region18: #{bottleneck_forward.3} parent=11 // pred_check_branch
          %226 = sbr.rel (%p224) target = $region20
        $region19: #{bottleneck_forward.3} parent=11 // pred_region
          _
        $region20: #{bottleneck_forward.3} parent=11 // pred_fallthru
          _
        // Predicated region
        $region21: #{bottleneck_forward.3} parent=11 // pred_check
          %p227 = pneg %p115
        $region22: #{bottleneck_forward.3} parent=11 // pred_check_branch
          %229 = sbr.rel (%p227) target = $region24
        $region23: #{bottleneck_forward.3} parent=11 // pred_region
          _
        $region24: #{bottleneck_forward.3} parent=11 // pred_fallthru
          _
        // Predicated region
        $region25: #{bottleneck_forward.3} parent=11 // pred_check
          %p230 = pneg %p136
        $region26: #{bottleneck_forward.3} parent=11 // pred_check_branch
          %232 = sbr.rel (%p230) target = $region28
        $region27: #{bottleneck_forward.3} parent=11 // pred_region
          %234 = vsyncadd [#allocation4], 0
          %s235 = sshll.u32 %s4, 4
          %s236 = int_to_ptr.hbm [resolvable:$true] %s235
          %s237 = sshll.u32 [#allocation3], 4
          %s238 = int_to_ptr.vmem [resolvable:$true] %s237
          %243 = dma.hbm_to_vmem [thread:$0]  %s236, 9216, %s238, [#allocation4], 64, 64, 4
        $region28: #{bottleneck_forward.3} parent=11 // pred_fallthru
          _
        // Predicated region
        $region29: #{bottleneck_forward.3} parent=11 // pred_check
          %p244 = pneg %p157
        $region30: #{bottleneck_forward.3} parent=11 // pred_check_branch
          %246 = sbr.rel (%p244) target = $region32
        $region31: #{bottleneck_forward.3} parent=11 // pred_region
          _
        $region32: #{bottleneck_forward.3} parent=11 // pred_fallthru
          _
        // Predicated region
        $region33: #{bottleneck_forward.3} parent=11 // pred_check
          %p247 = pneg %p178
        $region34: #{bottleneck_forward.3} parent=11 // pred_check_branch
          %249 = sbr.rel (%p247) target = $region36
        $region35: #{bottleneck_forward.3} parent=11 // pred_region
          _
        $region36: #{bottleneck_forward.3} parent=11 // pred_fallthru
          _
      $region12: #{bottleneck_forward.3} parent=5 // pred_fallthru
        _
      %p250 = scmp.lt.s32.totalorder %s14, 2
      // Predicated region
      $region37: #{bottleneck_forward.3} parent=5 // pred_check
        %p251 = pneg %p250
      $region38: #{bottleneck_forward.3} parent=5 // pred_check_branch
        %253 = sbr.rel (%p251) target = $region40
      $region39: #{bottleneck_forward.3} parent=5 // pred_region
        // Predicated region
        $region41: #{bottleneck_forward.3} parent=39 // pred_check
          %p254 = pneg %p46
        $region42: #{bottleneck_forward.3} parent=39 // pred_check_branch
          %256 = sbr.rel (%p254) target = $region44
        $region43: #{bottleneck_forward.3} parent=39 // pred_region
          %p257 = scmp.lt.s32.totalorder %s21, 1
          %s258 = scalar_select %p257, %s21, 1
          %s259 = smul.addr %s258, 8
          %s260 = smul.addr %s259, 4
          %s261 = scalar_lea.vmem %s0, %s260
        $region44: #{bottleneck_forward.3} parent=39 // pred_fallthru
          _
      $region40: #{bottleneck_forward.3} parent=5 // pred_fallthru
        _
      %p262 = scmp.le.s32.totalorder 1, %s14
      %p263 = scmp.lt.s32.totalorder %s14, 3
      %p264 = pnand %p262, %p263
      %p265 = pneg %p264
      // Predicated region
      $region45: #{bottleneck_forward.3} parent=5 // pred_check
        _
      $region46: #{bottleneck_forward.3} parent=5 // pred_check_branch
        %267 = sbr.rel (%p264) target = $region48
      $region47: #{bottleneck_forward.3} parent=5 // pred_region
        %s268 = ssub.s32 %s14, 1
        // Predicated region
        $region49: #{bottleneck_forward.3} parent=47 // pred_check
          %p269 = pneg %p136
        $region50: #{bottleneck_forward.3} parent=47 // pred_check_branch
          %271 = sbr.rel (%p269) target = $region52
        $region51: #{bottleneck_forward.3} parent=47 // pred_region
          %273 = dma.done [#allocation4], 9216
        $region52: #{bottleneck_forward.3} parent=47 // pred_fallthru
          _
        %p274 = scmp.lt.s32.totalorder %s23, 1
        %s275 = scalar_select %p274, %s23, 1
        %s276 = smul.addr %s275, 8
        %s277 = smul.addr %s276, 4
        %s278 = scalar_lea.vmem %s0, %s277
        %p279 = pneg %p52
        %p280 = pneg %p49
        %p281 = pneg %p73
        %p282 = pneg %p70
        %p283 = pneg %p94
        %p284 = pneg %p91
        %p285 = pneg %p115
        %p286 = pneg %p112
        %p287 = pneg %p136
        %p288 = pneg %p133
        %p289 = pneg %p157
        %p290 = pneg %p154
        %p291 = pneg %p178
        %p292 = pneg %p175
        %p293 = pneg %p206
        %p294 = pneg %p203
        %s295 = smul.u32 8, %s24
        %p296 = scmp.lt.s32.totalorder %s23, 1
        %s297 = scalar_select %p296, %s23, 1
        %p298 = scmp.lt.s32.totalorder %s295, 7
        %s299 = scalar_select %p298, %s295, 7
        %s300 = smul.addr %s297, 8
        %s301 = sadd.s32 %s299, %s300
        %s302 = smul.addr %s301, 4
        %s303 = scalar_lea.vmem %s7, %s302
        %p304 = scmp.lt.s32.totalorder %s23, 1
        %s305 = scalar_select %p304, %s23, 1
        %s306 = smul.addr %s305, 8
        %s307 = smul.addr %s306, 4
        %s308 = scalar_lea.vmem %s0, %s307
        %s309 = smul.u32 8, %s24
        %p310 = scmp.lt.s32.totalorder %s23, 1
        %s311 = scalar_select %p310, %s23, 1
        %p312 = scmp.lt.s32.totalorder %s309, 7
        %s313 = scalar_select %p312, %s309, 7
        %s314 = smul.addr %s311, 8
        %s315 = sadd.s32 %s313, %s314
        %s316 = smul.addr %s315, 4
        %s317 = scalar_lea.vmem %s7, %s316
        %s318 = smul.u32 8, %s24
        %p320 = scmp.eq.s32.totalorder %s24, 0
        // Predicated region
        $region53: #{bottleneck_forward.3} parent=47 // pred_check
          %p321 = pneg %p320
        $region54: #{bottleneck_forward.3} parent=47 // pred_check_branch
          %323 = sbr.rel (%p321) target = $region56
        $region55: #{bottleneck_forward.3} parent=47 // pred_region
          %324 = vst [vmem:[#allocation2] sm:$0xf] 0
          %325 = vst [vmem:[#allocation2 + $0x4] sm:$0x1] 0
          %326 = vst [vmem:[#allocation2 + $0x8] sm:$0xf] 0
          %327 = vst [vmem:[#allocation2 + $0xc] sm:$0x1] 0
          %328 = vst [vmem:[#allocation2 + $0x10] sm:$0xf] 0
          %329 = vst [vmem:[#allocation2 + $0x14] sm:$0x1] 0
          %330 = vst [vmem:[#allocation2 + $0x18] sm:$0xf] 0
          %331 = vst [vmem:[#allocation2 + $0x1c] sm:$0x1] 0
          %332 = vst [vmem:[#allocation2 + $0x20] sm:$0xf] 0
          %333 = vst [vmem:[#allocation2 + $0x24] sm:$0x1] 0
          %334 = vst [vmem:[#allocation2 + $0x28] sm:$0xf] 0
          %335 = vst [vmem:[#allocation2 + $0x2c] sm:$0x1] 0
          %336 = vst [vmem:[#allocation2 + $0x30] sm:$0xf] 0
          %337 = vst [vmem:[#allocation2 + $0x34] sm:$0x1] 0
          %338 = vst [vmem:[#allocation2 + $0x38] sm:$0xf] 0
          %339 = vst [vmem:[#allocation2 + $0x3c] sm:$0x1] 0
          %340 = vst [vmem:[#allocation2 + $0x40] sm:$0xf] 0
          %341 = vst [vmem:[#allocation2 + $0x44] sm:$0x1] 0
          %342 = vst [vmem:[#allocation2 + $0x48] sm:$0xf] 0
          %343 = vst [vmem:[#allocation2 + $0x4c] sm:$0x1] 0
          %v344 = vld [vmem:[%s308] sm:$0xf]
          %v345 = vld [vmem:[%s308 + $0x4] sm:$0xf]
          %v346 = vld [vmem:[%s308 + $0x8] sm:$0xf]
          %v347 = vld [vmem:[%s308 + $0xc] sm:$0xf]
          %v348 = vld [vmem:[%s308 + $0x10] sm:$0xf]
          %v349 = vld [vmem:[%s308 + $0x14] sm:$0xf]
          %v350 = vld [vmem:[%s308 + $0x18] sm:$0xf]
          %v351 = vld [vmem:[%s308 + $0x1c] sm:$0xf]
          %v352 = vld [vmem:[%s1] sm:$0xf]
          %v353 = vld [vmem:[%s1 + $0x4] sm:$0xf]
          %v362 = vunpack.c.l.b16 %v344
          %v363 = vunpack.c.l.b16 %v345
          %v364 = vunpack.c.l.b16 %v346
          %v365 = vunpack.c.l.b16 %v347
          %v366 = vunpack.c.l.b16 %v348
          %v367 = vunpack.c.l.b16 %v349
          %v368 = vunpack.c.l.b16 %v350
          %v369 = vunpack.c.l.b16 %v351
          %v370 = vpack.c.b16 %v363, %v362
          %v371 = vpack.c.b16 %v365, %v364
          %v372 = vpack.c.b16 %v367, %v366
          %v373 = vpack.c.b16 %v369, %v368
          %v376 = vunpack.c.l.b16 %v352
          %v377 = vunpack.c.l.b16 %v353
          %v378 = vpack.c.b16 %v377, %v376
          %vm380 = vcmask 130048
          %v382 = vsel %vm380, %v370, 0
          %v385 = vsel %vm380, %v371, 0
          %v388 = vsel %vm380, %v372, 0
          %v391 = vsel %vm380, %v373, 0
          %393 = vmatpush.bf16.msra.mxu0 0
          %394 = vmatpush.bf16.msra.mxu0 0
          %395 = vmatpush.bf16.msra.mxu0 0
          %396 = vmatpush.bf16.msra.mxu0 0
          %397 = vmatpush.bf16.msra.mxu0 0
          %398 = vmatpush.bf16.msra.mxu0 0
          %399 = vmatpush.bf16.msra.mxu0 0
          %400 = vmatpush.bf16.msra.mxu0 %v378
          %401 = vmatmul.bf16.gmra.mxu0 %v382
          %v402 = vpop.f32.mrf.mxu0
          %v403 = vadd.f32 0.0, %v402
          %v404 = vpop.f32.mrf.mxu0
          %v405 = vadd.f32 0.0, %v404
          %406 = vmatmul.bf16.gmra.mxu0 %v385
          %v407 = vpop.f32.mrf.mxu0
          %v408 = vadd.f32 0.0, %v407
          %v409 = vpop.f32.mrf.mxu0
          %v410 = vadd.f32 0.0, %v409
          %411 = vmatmul.bf16.gmra.mxu0 %v388
          %v412 = vpop.f32.mrf.mxu0
          %v413 = vadd.f32 0.0, %v412
          %v414 = vpop.f32.mrf.mxu0
          %v415 = vadd.f32 0.0, %v414
          %416 = vmatmul.bf16.gmra.mxu0 %v391
          %v417 = vpop.f32.mrf.mxu0
          %v418 = vadd.f32 0.0, %v417
          %v419 = vpop.f32.mrf.mxu0
          %v420 = vadd.f32 0.0, %v419
          %421 = vdwg.mxu0
          %v422 = vld [vmem:[%s2] sm:$0x1]
          %v424 = vperm.slane %v422, 0
          %v426 = vmul.f32 %v403, %v424
          %v427 = vmul.f32 %v405, %v424
          %v428 = vmul.f32 %v408, %v424
          %v429 = vmul.f32 %v410, %v424
          %v430 = vmul.f32 %v413, %v424
          %v431 = vmul.f32 %v415, %v424
          %v432 = vmul.f32 %v418, %v424
          %v433 = vmul.f32 %v420, %v424
          %v434 = vld [vmem:[%s3] sm:$0x1]
          %v436 = vperm.slane %v434, 0
          %v438 = vadd.f32 %v426, %v436
          %v439 = vadd.f32 %v427, %v436
          %v440 = vadd.f32 %v428, %v436
          %v441 = vadd.f32 %v429, %v436
          %v442 = vadd.f32 %v430, %v436
          %v443 = vadd.f32 %v431, %v436
          %v444 = vadd.f32 %v432, %v436
          %v445 = vadd.f32 %v433, %v436
          %v446 = vmax.f32 %v438, 0.0
          %v447 = vmax.f32 %v439, 0.0
          %v448 = vmax.f32 %v440, 0.0
          %v449 = vmax.f32 %v441, 0.0
          %v450 = vmax.f32 %v442, 0.0
          %v451 = vmax.f32 %v443, 0.0
          %v452 = vmax.f32 %v444, 0.0
          %v453 = vmax.f32 %v445, 0.0
          %v454 = vpack.c.bf16 %v446, %v446
          %v455 = vpack.c.bf16 %v447, %v447
          %v456 = vpack.c.bf16 %v448, %v448
          %v457 = vpack.c.bf16 %v449, %v449
          %v458 = vpack.c.bf16 %v450, %v450
          %v459 = vpack.c.bf16 %v451, %v451
          %v460 = vpack.c.bf16 %v452, %v452
          %v461 = vpack.c.bf16 %v453, %v453
          %v463 = vshrl.u32 %v454, 16
          %v465 = vrot.slane %v463, 7
          %v466 = vshll.u32 %v454, 16
          %v468 = vor.u32 %v465, %v466
          %v469 = vrot.slane %v465, 4
          %v471 = vshrl.u32 %v455, 16
          %v473 = vrot.slane %v471, 7
          %v474 = vshll.u32 %v455, 16
          %v476 = vor.u32 %v473, %v474
          %v477 = vrot.slane %v473, 4
          %v479 = vshrl.u32 %v456, 16
          %v481 = vrot.slane %v479, 7
          %v482 = vshll.u32 %v456, 16
          %v484 = vor.u32 %v481, %v482
          %v485 = vrot.slane %v481, 4
          %v487 = vshrl.u32 %v457, 16
          %v489 = vrot.slane %v487, 7
          %v490 = vshll.u32 %v457, 16
          %v492 = vor.u32 %v489, %v490
          %v493 = vrot.slane %v489, 4
          %v495 = vshrl.u32 %v458, 16
          %v497 = vrot.slane %v495, 7
          %v498 = vshll.u32 %v458, 16
          %v500 = vor.u32 %v497, %v498
          %v501 = vrot.slane %v497, 4
          %v503 = vshrl.u32 %v459, 16
          %v505 = vrot.slane %v503, 7
          %v506 = vshll.u32 %v459, 16
          %v508 = vor.u32 %v505, %v506
          %v509 = vrot.slane %v505, 4
          %v511 = vshrl.u32 %v460, 16
          %v513 = vrot.slane %v511, 7
          %v514 = vshll.u32 %v460, 16
          %v516 = vor.u32 %v513, %v514
          %v517 = vrot.slane %v513, 4
          %v519 = vshrl.u32 %v461, 16
          %v521 = vrot.slane %v519, 7
          %v522 = vshll.u32 %v461, 16
          %v524 = vor.u32 %v521, %v522
          %v525 = vrot.slane %v521, 4
          %s542 = scalar_lea.vmem [#allocation2], 8
          %vm543 = vcmask 1043456
          %vm544 = vsmask.f32 7938
          %vm545 = vmand %vm543, %vm544
          %v546 = vld [vmem:[%s542] sm:$0xf]
          %v547 = vsel %vm545, %v468, %v546
          %548 = vst [vmem:[%s542] sm:$0xf] %v547
          %vm549 = vcmask 1040384
          %vm550 = vsmask.f32 256
          %vm551 = vmand %vm549, %vm550
          %v552 = vld [vmem:[%s542 + $0x4] sm:$0x1]
          %v553 = vsel %vm551, %v469, %v552
          %554 = vst [vmem:[%s542 + $0x4] sm:$0x1] %v553
          %v555 = vld [vmem:[%s542 + $0x8] sm:$0xf]
          %v556 = vsel %vm545, %v476, %v555
          %557 = vst [vmem:[%s542 + $0x8] sm:$0xf] %v556
          %v558 = vld [vmem:[%s542 + $0xc] sm:$0x1]
          %v559 = vsel %vm551, %v477, %v558
          %560 = vst [vmem:[%s542 + $0xc] sm:$0x1] %v559
          %v561 = vld [vmem:[%s542 + $0x10] sm:$0xf]
          %v562 = vsel %vm545, %v484, %v561
          %563 = vst [vmem:[%s542 + $0x10] sm:$0xf] %v562
          %v564 = vld [vmem:[%s542 + $0x14] sm:$0x1]
          %v565 = vsel %vm551, %v485, %v564
          %566 = vst [vmem:[%s542 + $0x14] sm:$0x1] %v565
          %v567 = vld [vmem:[%s542 + $0x18] sm:$0xf]
          %v568 = vsel %vm545, %v492, %v567
          %569 = vst [vmem:[%s542 + $0x18] sm:$0xf] %v568
          %v570 = vld [vmem:[%s542 + $0x1c] sm:$0x1]
          %v571 = vsel %vm551, %v493, %v570
          %572 = vst [vmem:[%s542 + $0x1c] sm:$0x1] %v571
          %v573 = vld [vmem:[%s542 + $0x20] sm:$0xf]
          %v574 = vsel %vm545, %v500, %v573
          %575 = vst [vmem:[%s542 + $0x20] sm:$0xf] %v574
          %v576 = vld [vmem:[%s542 + $0x24] sm:$0x1]
          %v577 = vsel %vm551, %v501, %v576
          %578 = vst [vmem:[%s542 + $0x24] sm:$0x1] %v577
          %v579 = vld [vmem:[%s542 + $0x28] sm:$0xf]
          %v580 = vsel %vm545, %v508, %v579
          %581 = vst [vmem:[%s542 + $0x28] sm:$0xf] %v580
          %v582 = vld [vmem:[%s542 + $0x2c] sm:$0x1]
          %v583 = vsel %vm551, %v509, %v582
          %584 = vst [vmem:[%s542 + $0x2c] sm:$0x1] %v583
          %v585 = vld [vmem:[%s542 + $0x30] sm:$0xf]
          %v586 = vsel %vm545, %v516, %v585
          %587 = vst [vmem:[%s542 + $0x30] sm:$0xf] %v586
          %v588 = vld [vmem:[%s542 + $0x34] sm:$0x1]
          %v589 = vsel %vm551, %v517, %v588
          %590 = vst [vmem:[%s542 + $0x34] sm:$0x1] %v589
          %v591 = vld [vmem:[%s542 + $0x38] sm:$0xf]
          %v592 = vsel %vm545, %v524, %v591
          %593 = vst [vmem:[%s542 + $0x38] sm:$0xf] %v592
          %v594 = vld [vmem:[%s542 + $0x3c] sm:$0x1]
          %v595 = vsel %vm551, %v525, %v594
          %596 = vst [vmem:[%s542 + $0x3c] sm:$0x1] %v595
        $region56: #{bottleneck_forward.3} parent=47 // pred_fallthru
          _
        %s597 = smul.u32 %s24, 8
        %s598 = smul.u32 %s597, 2
        %s599 = smul.addr %s598, 4
        %s600 = scalar_lea.vmem [#allocation2], %s599
        %v601 = vld [vmem:[%s600] sm:$0xf]
        %v602 = vld [vmem:[%s600 + $0x8] sm:$0xf]
        %v603 = vld [vmem:[%s600 + $0x10] sm:$0xf]
        %v604 = vld [vmem:[%s600 + $0x18] sm:$0xf]
        %v605 = vld [vmem:[%s600 + $0x20] sm:$0xf]
        %v606 = vld [vmem:[%s600 + $0x28] sm:$0xf]
        %v607 = vld [vmem:[%s600 + $0x30] sm:$0xf]
        %v608 = vld [vmem:[%s600 + $0x38] sm:$0xf]
        %v609 = vld [vmem:[#allocation3] sm:$0xf]
        %v610 = vld [vmem:[#allocation3 + $0x4] sm:$0xf]
        %v611 = vld [vmem:[#allocation3 + $0x8] sm:$0xf]
        %v612 = vld [vmem:[#allocation3 + $0xc] sm:$0xf]
        %v613 = vld [vmem:[#allocation3 + $0x10] sm:$0xf]
        %v614 = vld [vmem:[#allocation3 + $0x14] sm:$0xf]
        %v615 = vld [vmem:[#allocation3 + $0x18] sm:$0xf]
        %v616 = vld [vmem:[#allocation3 + $0x1c] sm:$0xf]
        %v617 = vld [vmem:[#allocation3 + $0x20] sm:$0xf]
        %v618 = vld [vmem:[#allocation3 + $0x24] sm:$0xf]
        %v619 = vld [vmem:[#allocation3 + $0x28] sm:$0xf]
        %v620 = vld [vmem:[#allocation3 + $0x2c] sm:$0xf]
        %v621 = vld [vmem:[#allocation3 + $0x30] sm:$0xf]
        %v622 = vld [vmem:[#allocation3 + $0x34] sm:$0xf]
        %v623 = vld [vmem:[#allocation3 + $0x38] sm:$0xf]
        %v624 = vld [vmem:[#allocation3 + $0x3c] sm:$0xf]
        %v625 = vld [vmem:[%s600 + $0x4] sm:$0x1]
        %v626 = vld [vmem:[%s600 + $0xc] sm:$0x1]
        %v627 = vld [vmem:[%s600 + $0x14] sm:$0x1]
        %v628 = vld [vmem:[%s600 + $0x1c] sm:$0x1]
        %v629 = vld [vmem:[%s600 + $0x24] sm:$0x1]
        %v630 = vld [vmem:[%s600 + $0x2c] sm:$0x1]
        %v631 = vld [vmem:[%s600 + $0x34] sm:$0x1]
        %v632 = vld [vmem:[%s600 + $0x3c] sm:$0x1]
        %vm633 = vsmask.f32 3328
        %vm634 = vsmask.f32 7440
        %vm635 = vmor %vm633, %vm634
        %v637 = vshrl.u32 %v601, 16
        %v639 = vrot.slane %v637, 4
        %v640 = vshll.u32 %v601, 16
        %v642 = vrot.slane %v640, 5
        %v643 = vor.u32 %v639, %v642
        %v644 = vrot.slane %v643, 4
        %v646 = vshll.u32 %v625, 16
        %v648 = vrot.slane %v646, 5
        %v649 = vsel %vm635, %v644, %v648
        %v651 = vshrl.u32 %v602, 16
        %v653 = vrot.slane %v651, 4
        %v654 = vshll.u32 %v602, 16
        %v656 = vrot.slane %v654, 5
        %v657 = vor.u32 %v653, %v656
        %v658 = vrot.slane %v657, 4
        %v660 = vshll.u32 %v626, 16
        %v662 = vrot.slane %v660, 5
        %v663 = vsel %vm635, %v658, %v662
        %v665 = vshrl.u32 %v603, 16
        %v667 = vrot.slane %v665, 4
        %v668 = vshll.u32 %v603, 16
        %v670 = vrot.slane %v668, 5
        %v671 = vor.u32 %v667, %v670
        %v672 = vrot.slane %v671, 4
        %v674 = vshll.u32 %v627, 16
        %v676 = vrot.slane %v674, 5
        %v677 = vsel %vm635, %v672, %v676
        %v679 = vshrl.u32 %v604, 16
        %v681 = vrot.slane %v679, 4
        %v682 = vshll.u32 %v604, 16
        %v684 = vrot.slane %v682, 5
        %v685 = vor.u32 %v681, %v684
        %v686 = vrot.slane %v685, 4
        %v688 = vshll.u32 %v628, 16
        %v690 = vrot.slane %v688, 5
        %v691 = vsel %vm635, %v686, %v690
        %v693 = vshrl.u32 %v605, 16
        %v695 = vrot.slane %v693, 4
        %v696 = vshll.u32 %v605, 16
        %v698 = vrot.slane %v696, 5
        %v699 = vor.u32 %v695, %v698
        %v700 = vrot.slane %v699, 4
        %v702 = vshll.u32 %v629, 16
        %v704 = vrot.slane %v702, 5
        %v705 = vsel %vm635, %v700, %v704
        %v707 = vshrl.u32 %v606, 16
        %v709 = vrot.slane %v707, 4
        %v710 = vshll.u32 %v606, 16
        %v712 = vrot.slane %v710, 5
        %v713 = vor.u32 %v709, %v712
        %v714 = vrot.slane %v713, 4
        %v716 = vshll.u32 %v630, 16
        %v718 = vrot.slane %v716, 5
        %v719 = vsel %vm635, %v714, %v718
        %v721 = vshrl.u32 %v607, 16
        %v723 = vrot.slane %v721, 4
        %v724 = vshll.u32 %v607, 16
        %v726 = vrot.slane %v724, 5
        %v727 = vor.u32 %v723, %v726
        %v728 = vrot.slane %v727, 4
        %v730 = vshll.u32 %v631, 16
        %v732 = vrot.slane %v730, 5
        %v733 = vsel %vm635, %v728, %v732
        %v735 = vshrl.u32 %v608, 16
        %v737 = vrot.slane %v735, 4
        %v738 = vshll.u32 %v608, 16
        %v740 = vrot.slane %v738, 5
        %v741 = vor.u32 %v737, %v740
        %v742 = vrot.slane %v741, 4
        %v744 = vshll.u32 %v632, 16
        %v746 = vrot.slane %v744, 5
        %v747 = vsel %vm635, %v742, %v746
        %s748 = scalar_lea.vmem [#allocation3], 64
        %v749 = vld [vmem:[%s748] sm:$0xf]
        %v750 = vld [vmem:[%s748 + $0x4] sm:$0xf]
        %v751 = vld [vmem:[%s748 + $0x8] sm:$0xf]
        %v752 = vld [vmem:[%s748 + $0xc] sm:$0xf]
        %v753 = vld [vmem:[%s748 + $0x10] sm:$0xf]
        %v754 = vld [vmem:[%s748 + $0x14] sm:$0xf]
        %v755 = vld [vmem:[%s748 + $0x18] sm:$0xf]
        %v756 = vld [vmem:[%s748 + $0x1c] sm:$0xf]
        %v757 = vld [vmem:[%s748 + $0x20] sm:$0xf]
        %v758 = vld [vmem:[%s748 + $0x24] sm:$0xf]
        %v759 = vld [vmem:[%s748 + $0x28] sm:$0xf]
        %v760 = vld [vmem:[%s748 + $0x2c] sm:$0xf]
        %v761 = vld [vmem:[%s748 + $0x30] sm:$0xf]
        %v762 = vld [vmem:[%s748 + $0x34] sm:$0xf]
        %v763 = vld [vmem:[%s748 + $0x38] sm:$0xf]
        %v764 = vld [vmem:[%s748 + $0x3c] sm:$0xf]
        %v765 = vunpack.c.l.b16 %v649
        %v766 = vunpack.c.l.b16 %v663
        %v767 = vunpack.c.l.b16 %v677
        %v768 = vunpack.c.l.b16 %v691
        %v769 = vunpack.c.l.b16 %v705
        %v770 = vunpack.c.l.b16 %v719
        %v771 = vunpack.c.l.b16 %v733
        %v772 = vunpack.c.l.b16 %v747
        %v773 = vpack.c.b16 %v766, %v765
        %v774 = vpack.c.b16 %v768, %v767
        %v775 = vpack.c.b16 %v770, %v769
        %v776 = vpack.c.b16 %v772, %v771
        %v797 = vunpack.c.l.b16 %v749
        %v798 = vunpack.c.l.b16 %v750
        %v799 = vunpack.c.l.b16 %v751
        %v800 = vunpack.c.l.b16 %v752
        %v801 = vunpack.c.l.b16 %v753
        %v802 = vunpack.c.l.b16 %v754
        %v803 = vunpack.c.l.b16 %v755
        %v804 = vunpack.c.l.b16 %v756
        %v805 = vunpack.c.l.b16 %v757
        %v806 = vunpack.c.l.b16 %v758
        %v807 = vunpack.c.l.b16 %v759
        %v808 = vunpack.c.l.b16 %v760
        %v809 = vunpack.c.l.b16 %v761
        %v810 = vunpack.c.l.b16 %v762
        %v811 = vunpack.c.l.b16 %v763
        %v812 = vunpack.c.l.b16 %v764
        %v813 = vpack.c.b16 %v798, %v797
        %v814 = vpack.c.b16 %v800, %v799
        %v815 = vpack.c.b16 %v802, %v801
        %v816 = vpack.c.b16 %v804, %v803
        %v817 = vpack.c.b16 %v806, %v805
        %v818 = vpack.c.b16 %v808, %v807
        %v819 = vpack.c.b16 %v810, %v809
        %v820 = vpack.c.b16 %v812, %v811
        %829 = vmatpush.bf16.msra.mxu0 %v820
        %830 = vmatpush.bf16.msra.mxu0 %v819
        %831 = vmatpush.bf16.msra.mxu0 %v818
        %832 = vmatpush.bf16.msra.mxu0 %v817
        %833 = vmatpush.bf16.msra.mxu0 %v816
        %834 = vmatpush.bf16.msra.mxu0 %v815
        %835 = vmatpush.bf16.msra.mxu0 %v814
        %836 = vmatpush.bf16.msra.mxu0 %v813
        %837 = vmatmul.bf16.gmra.mxu0 %v773
        %v838 = vpop.f32.mrf.mxu0
        %v839 = vadd.f32 0.0, %v838
        %v840 = vpop.f32.mrf.mxu0
        %v841 = vadd.f32 0.0, %v840
        %842 = vmatmul.bf16.gmra.mxu0 %v774
        %v843 = vpop.f32.mrf.mxu0
        %v844 = vadd.f32 0.0, %v843
        %v845 = vpop.f32.mrf.mxu0
        %v846 = vadd.f32 0.0, %v845
        %847 = vmatmul.bf16.gmra.mxu0 %v775
        %v848 = vpop.f32.mrf.mxu0
        %v849 = vadd.f32 0.0, %v848
        %v850 = vpop.f32.mrf.mxu0
        %v851 = vadd.f32 0.0, %v850
        %852 = vmatmul.bf16.gmra.mxu0 %v776
        %v853 = vpop.f32.mrf.mxu0
        %v854 = vadd.f32 0.0, %v853
        %v855 = vpop.f32.mrf.mxu0
        %v856 = vadd.f32 0.0, %v855
        %857 = vdwg.mxu0
        %v866 = vunpack.c.l.b16 %v601
        %v867 = vunpack.c.l.b16 %v602
        %v868 = vunpack.c.l.b16 %v603
        %v869 = vunpack.c.l.b16 %v604
        %v870 = vunpack.c.l.b16 %v605
        %v871 = vunpack.c.l.b16 %v606
        %v872 = vunpack.c.l.b16 %v607
        %v873 = vunpack.c.l.b16 %v608
        %v874 = vpack.c.b16 %v867, %v866
        %v875 = vpack.c.b16 %v869, %v868
        %v876 = vpack.c.b16 %v871, %v870
        %v877 = vpack.c.b16 %v873, %v872
        %v898 = vunpack.c.l.b16 %v609
        %v899 = vunpack.c.l.b16 %v610
        %v900 = vunpack.c.l.b16 %v611
        %v901 = vunpack.c.l.b16 %v612
        %v902 = vunpack.c.l.b16 %v613
        %v903 = vunpack.c.l.b16 %v614
        %v904 = vunpack.c.l.b16 %v615
        %v905 = vunpack.c.l.b16 %v616
        %v906 = vunpack.c.l.b16 %v617
        %v907 = vunpack.c.l.b16 %v618
        %v908 = vunpack.c.l.b16 %v619
        %v909 = vunpack.c.l.b16 %v620
        %v910 = vunpack.c.l.b16 %v621
        %v911 = vunpack.c.l.b16 %v622
        %v912 = vunpack.c.l.b16 %v623
        %v913 = vunpack.c.l.b16 %v624
        %v914 = vpack.c.b16 %v899, %v898
        %v915 = vpack.c.b16 %v901, %v900
        %v916 = vpack.c.b16 %v903, %v902
        %v917 = vpack.c.b16 %v905, %v904
        %v918 = vpack.c.b16 %v907, %v906
        %v919 = vpack.c.b16 %v909, %v908
        %v920 = vpack.c.b16 %v911, %v910
        %v921 = vpack.c.b16 %v913, %v912
        %930 = vmatpush.bf16.msra.mxu0 %v921
        %931 = vmatpush.bf16.msra.mxu0 %v920
        %932 = vmatpush.bf16.msra.mxu0 %v919
        %933 = vmatpush.bf16.msra.mxu0 %v918
        %934 = vmatpush.bf16.msra.mxu0 %v917
        %935 = vmatpush.bf16.msra.mxu0 %v916
        %936 = vmatpush.bf16.msra.mxu0 %v915
        %937 = vmatpush.bf16.msra.mxu0 %v914
        %938 = vmatmul.bf16.gmra.mxu0 %v874
        %v939 = vpop.f32.mrf.mxu0
        %v940 = vadd.f32 %v839, %v939
        %v941 = vpop.f32.mrf.mxu0
        %v942 = vadd.f32 %v841, %v941
        %943 = vmatmul.bf16.gmra.mxu0 %v875
        %v944 = vpop.f32.mrf.mxu0
        %v945 = vadd.f32 %v844, %v944
        %v946 = vpop.f32.mrf.mxu0
        %v947 = vadd.f32 %v846, %v946
        %948 = vmatmul.bf16.gmra.mxu0 %v876
        %v949 = vpop.f32.mrf.mxu0
        %v950 = vadd.f32 %v849, %v949
        %v951 = vpop.f32.mrf.mxu0
        %v952 = vadd.f32 %v851, %v951
        %953 = vmatmul.bf16.gmra.mxu0 %v877
        %v954 = vpop.f32.mrf.mxu0
        %v955 = vadd.f32 %v854, %v954
        %v956 = vpop.f32.mrf.mxu0
        %v957 = vadd.f32 %v856, %v956
        %958 = vdwg.mxu0
        %v959 = vld [vmem:[%s600] sm:$0xe]
        %v960 = vld [vmem:[%s600 + $0x8] sm:$0xe]
        %v961 = vld [vmem:[%s600 + $0x10] sm:$0xe]
        %v962 = vld [vmem:[%s600 + $0x18] sm:$0xe]
        %v963 = vld [vmem:[%s600 + $0x20] sm:$0xe]
        %v964 = vld [vmem:[%s600 + $0x28] sm:$0xe]
        %v965 = vld [vmem:[%s600 + $0x30] sm:$0xe]
        %v966 = vld [vmem:[%s600 + $0x38] sm:$0xe]
        %vm983 = vcmask 1042432
        %vm984 = vcmask 1046532
        %vm985 = vmor %vm983, %vm984
        %v986 = vrot.slane %v959, 5
        %v987 = vrot.slane %v986, 4
        %v988 = vrot.slane %v625, 5
        %v989 = vsel %vm985, %v987, %v988
        %v990 = vrot.slane %v960, 5
        %v991 = vrot.slane %v990, 4
        %v992 = vrot.slane %v626, 5
        %v993 = vsel %vm985, %v991, %v992
        %v994 = vrot.slane %v961, 5
        %v995 = vrot.slane %v994, 4
        %v996 = vrot.slane %v627, 5
        %v997 = vsel %vm985, %v995, %v996
        %v998 = vrot.slane %v962, 5
        %v999 = vrot.slane %v998, 4
        %v1000 = vrot.slane %v628, 5
        %v1001 = vsel %vm985, %v999, %v1000
        %v1002 = vrot.slane %v963, 5
        %v1003 = vrot.slane %v1002, 4
        %v1004 = vrot.slane %v629, 5
        %v1005 = vsel %vm985, %v1003, %v1004
        %v1006 = vrot.slane %v964, 5
        %v1007 = vrot.slane %v1006, 4
        %v1008 = vrot.slane %v630, 5
        %v1009 = vsel %vm985, %v1007, %v1008
        %v1010 = vrot.slane %v965, 5
        %v1011 = vrot.slane %v1010, 4
        %v1012 = vrot.slane %v631, 5
        %v1013 = vsel %vm985, %v1011, %v1012
        %v1014 = vrot.slane %v966, 5
        %v1015 = vrot.slane %v1014, 4
        %v1016 = vrot.slane %v632, 5
        %v1017 = vsel %vm985, %v1015, %v1016
        %s1018 = scalar_lea.vmem [#allocation3], 128
        %v1019 = vld [vmem:[%s1018] sm:$0xf]
        %v1020 = vld [vmem:[%s1018 + $0x4] sm:$0xf]
        %v1021 = vld [vmem:[%s1018 + $0x8] sm:$0xf]
        %v1022 = vld [vmem:[%s1018 + $0xc] sm:$0xf]
        %v1023 = vld [vmem:[%s1018 + $0x10] sm:$0xf]
        %v1024 = vld [vmem:[%s1018 + $0x14] sm:$0xf]
        %v1025 = vld [vmem:[%s1018 + $0x18] sm:$0xf]
        %v1026 = vld [vmem:[%s1018 + $0x1c] sm:$0xf]
        %v1027 = vld [vmem:[%s1018 + $0x20] sm:$0xf]
        %v1028 = vld [vmem:[%s1018 + $0x24] sm:$0xf]
        %v1029 = vld [vmem:[%s1018 + $0x28] sm:$0xf]
        %v1030 = vld [vmem:[%s1018 + $0x2c] sm:$0xf]
        %v1031 = vld [vmem:[%s1018 + $0x30] sm:$0xf]
        %v1032 = vld [vmem:[%s1018 + $0x34] sm:$0xf]
        %v1033 = vld [vmem:[%s1018 + $0x38] sm:$0xf]
        %v1034 = vld [vmem:[%s1018 + $0x3c] sm:$0xf]
        %v1035 = vunpack.c.l.b16 %v989
        %v1036 = vunpack.c.l.b16 %v993
        %v1037 = vunpack.c.l.b16 %v997
        %v1038 = vunpack.c.l.b16 %v1001
        %v1039 = vunpack.c.l.b16 %v1005
        %v1040 = vunpack.c.l.b16 %v1009
        %v1041 = vunpack.c.l.b16 %v1013
        %v1042 = vunpack.c.l.b16 %v1017
        %v1043 = vpack.c.b16 %v1036, %v1035
        %v1044 = vpack.c.b16 %v1038, %v1037
        %v1045 = vpack.c.b16 %v1040, %v1039
        %v1046 = vpack.c.b16 %v1042, %v1041
        %v1067 = vunpack.c.l.b16 %v1019
        %v1068 = vunpack.c.l.b16 %v1020
        %v1069 = vunpack.c.l.b16 %v1021
        %v1070 = vunpack.c.l.b16 %v1022
        %v1071 = vunpack.c.l.b16 %v1023
        %v1072 = vunpack.c.l.b16 %v1024
        %v1073 = vunpack.c.l.b16 %v1025
        %v1074 = vunpack.c.l.b16 %v1026
        %v1075 = vunpack.c.l.b16 %v1027
        %v1076 = vunpack.c.l.b16 %v1028
        %v1077 = vunpack.c.l.b16 %v1029
        %v1078 = vunpack.c.l.b16 %v1030
        %v1079 = vunpack.c.l.b16 %v1031
        %v1080 = vunpack.c.l.b16 %v1032
        %v1081 = vunpack.c.l.b16 %v1033
        %v1082 = vunpack.c.l.b16 %v1034
        %v1083 = vpack.c.b16 %v1068, %v1067
        %v1084 = vpack.c.b16 %v1070, %v1069
        %v1085 = vpack.c.b16 %v1072, %v1071
        %v1086 = vpack.c.b16 %v1074, %v1073
        %v1087 = vpack.c.b16 %v1076, %v1075
        %v1088 = vpack.c.b16 %v1078, %v1077
        %v1089 = vpack.c.b16 %v1080, %v1079
        %v1090 = vpack.c.b16 %v1082, %v1081
        %1099 = vmatpush.bf16.msra.mxu0 %v1090
        %1100 = vmatpush.bf16.msra.mxu0 %v1089
        %1101 = vmatpush.bf16.msra.mxu0 %v1088
        %1102 = vmatpush.bf16.msra.mxu0 %v1087
        %1103 = vmatpush.bf16.msra.mxu0 %v1086
        %1104 = vmatpush.bf16.msra.mxu0 %v1085
        %1105 = vmatpush.bf16.msra.mxu0 %v1084
        %1106 = vmatpush.bf16.msra.mxu0 %v1083
        %1107 = vmatmul.bf16.gmra.mxu0 %v1043
        %v1108 = vpop.f32.mrf.mxu0
        %v1109 = vadd.f32 0.0, %v1108
        %v1110 = vpop.f32.mrf.mxu0
        %v1111 = vadd.f32 0.0, %v1110
        %1112 = vmatmul.bf16.gmra.mxu0 %v1044
        %v1113 = vpop.f32.mrf.mxu0
        %v1114 = vadd.f32 0.0, %v1113
        %v1115 = vpop.f32.mrf.mxu0
        %v1116 = vadd.f32 0.0, %v1115
        %1117 = vmatmul.bf16.gmra.mxu0 %v1045
        %v1118 = vpop.f32.mrf.mxu0
        %v1119 = vadd.f32 0.0, %v1118
        %v1120 = vpop.f32.mrf.mxu0
        %v1121 = vadd.f32 0.0, %v1120
        %1122 = vmatmul.bf16.gmra.mxu0 %v1046
        %v1123 = vpop.f32.mrf.mxu0
        %v1124 = vadd.f32 0.0, %v1123
        %v1125 = vpop.f32.mrf.mxu0
        %v1126 = vadd.f32 0.0, %v1125
        %1127 = vdwg.mxu0
        %v1128 = vadd.f32 %v940, %v1109
        %v1129 = vadd.f32 %v942, %v1111
        %v1130 = vadd.f32 %v945, %v1114
        %v1131 = vadd.f32 %v947, %v1116
        %v1132 = vadd.f32 %v950, %v1119
        %v1133 = vadd.f32 %v952, %v1121
        %v1134 = vadd.f32 %v955, %v1124
        %v1135 = vadd.f32 %v957, %v1126
        %s1136 = sadd.s32 %s597, 1
        %s1137 = smul.u32 %s1136, 2
        %s1138 = smul.addr %s1137, 4
        %s1139 = scalar_lea.vmem [#allocation2], %s1138
        %v1140 = vld [vmem:[%s1139] sm:$0xf]
        %v1141 = vld [vmem:[%s1139 + $0x8] sm:$0xf]
        %v1142 = vld [vmem:[%s1139 + $0x10] sm:$0xf]
        %v1143 = vld [vmem:[%s1139 + $0x18] sm:$0xf]
        %v1144 = vld [vmem:[%s1139 + $0x20] sm:$0xf]
        %v1145 = vld [vmem:[%s1139 + $0x28] sm:$0xf]
        %v1146 = vld [vmem:[%s1139 + $0x30] sm:$0xf]
        %v1147 = vld [vmem:[%s1139 + $0x38] sm:$0xf]
        %s1148 = scalar_lea.vmem [#allocation3], 192
        %v1149 = vld [vmem:[%s1148] sm:$0xf]
        %v1150 = vld [vmem:[%s1148 + $0x4] sm:$0xf]
        %v1151 = vld [vmem:[%s1148 + $0x8] sm:$0xf]
        %v1152 = vld [vmem:[%s1148 + $0xc] sm:$0xf]
        %v1153 = vld [vmem:[%s1148 + $0x10] sm:$0xf]
        %v1154 = vld [vmem:[%s1148 + $0x14] sm:$0xf]
        %v1155 = vld [vmem:[%s1148 + $0x18] sm:$0xf]
        %v1156 = vld [vmem:[%s1148 + $0x1c] sm:$0xf]
        %v1157 = vld [vmem:[%s1148 + $0x20] sm:$0xf]
        %v1158 = vld [vmem:[%s1148 + $0x24] sm:$0xf]
        %v1159 = vld [vmem:[%s1148 + $0x28] sm:$0xf]
        %v1160 = vld [vmem:[%s1148 + $0x2c] sm:$0xf]
        %v1161 = vld [vmem:[%s1148 + $0x30] sm:$0xf]
        %v1162 = vld [vmem:[%s1148 + $0x34] sm:$0xf]
        %v1163 = vld [vmem:[%s1148 + $0x38] sm:$0xf]
        %v1164 = vld [vmem:[%s1148 + $0x3c] sm:$0xf]
        %v1173 = vunpack.c.l.b16 %v1140
        %v1174 = vunpack.c.l.b16 %v1141
        %v1175 = vunpack.c.l.b16 %v1142
        %v1176 = vunpack.c.l.b16 %v1143
        %v1177 = vunpack.c.l.b16 %v1144
        %v1178 = vunpack.c.l.b16 %v1145
        %v1179 = vunpack.c.l.b16 %v1146
        %v1180 = vunpack.c.l.b16 %v1147
        %v1181 = vpack.c.b16 %v1174, %v1173
        %v1182 = vpack.c.b16 %v1176, %v1175
        %v1183 = vpack.c.b16 %v1178, %v1177
        %v1184 = vpack.c.b16 %v1180, %v1179
        %v1205 = vunpack.c.l.b16 %v1149
        %v1206 = vunpack.c.l.b16 %v1150
        %v1207 = vunpack.c.l.b16 %v1151
        %v1208 = vunpack.c.l.b16 %v1152
        %v1209 = vunpack.c.l.b16 %v1153
        %v1210 = vunpack.c.l.b16 %v1154
        %v1211 = vunpack.c.l.b16 %v1155
        %v1212 = vunpack.c.l.b16 %v1156
        %v1213 = vunpack.c.l.b16 %v1157
        %v1214 = vunpack.c.l.b16 %v1158
        %v1215 = vunpack.c.l.b16 %v1159
        %v1216 = vunpack.c.l.b16 %v1160
        %v1217 = vunpack.c.l.b16 %v1161
        %v1218 = vunpack.c.l.b16 %v1162
        %v1219 = vunpack.c.l.b16 %v1163
        %v1220 = vunpack.c.l.b16 %v1164
        %v1221 = vpack.c.b16 %v1206, %v1205
        %v1222 = vpack.c.b16 %v1208, %v1207
        %v1223 = vpack.c.b16 %v1210, %v1209
        %v1224 = vpack.c.b16 %v1212, %v1211
        %v1225 = vpack.c.b16 %v1214, %v1213
        %v1226 = vpack.c.b16 %v1216, %v1215
        %v1227 = vpack.c.b16 %v1218, %v1217
        %v1228 = vpack.c.b16 %v1220, %v1219
        %1237 = vmatpush.bf16.msra.mxu0 %v1228
        %1238 = vmatpush.bf16.msra.mxu0 %v1227
        %1239 = vmatpush.bf16.msra.mxu0 %v1226
        %1240 = vmatpush.bf16.msra.mxu0 %v1225
        %1241 = vmatpush.bf16.msra.mxu0 %v1224
        %1242 = vmatpush.bf16.msra.mxu0 %v1223
        %1243 = vmatpush.bf16.msra.mxu0 %v1222
        %1244 = vmatpush.bf16.msra.mxu0 %v1221
        %1245 = vmatmul.bf16.gmra.mxu0 %v1181
        %v1246 = vpop.f32.mrf.mxu0
        %v1247 = vadd.f32 0.0, %v1246
        %v1248 = vpop.f32.mrf.mxu0
        %v1249 = vadd.f32 0.0, %v1248
        %1250 = vmatmul.bf16.gmra.mxu0 %v1182
        %v1251 = vpop.f32.mrf.mxu0
        %v1252 = vadd.f32 0.0, %v1251
        %v1253 = vpop.f32.mrf.mxu0
        %v1254 = vadd.f32 0.0, %v1253
        %1255 = vmatmul.bf16.gmra.mxu0 %v1183
        %v1256 = vpop.f32.mrf.mxu0
        %v1257 = vadd.f32 0.0, %v1256
        %v1258 = vpop.f32.mrf.mxu0
        %v1259 = vadd.f32 0.0, %v1258
        %1260 = vmatmul.bf16.gmra.mxu0 %v1184
        %v1261 = vpop.f32.mrf.mxu0
        %v1262 = vadd.f32 0.0, %v1261
        %v1263 = vpop.f32.mrf.mxu0
        %v1264 = vadd.f32 0.0, %v1263
        %1265 = vdwg.mxu0
        %v1266 = vadd.f32 %v1128, %v1247
        %v1267 = vadd.f32 %v1129, %v1249
        %v1268 = vadd.f32 %v1130, %v1252
        %v1269 = vadd.f32 %v1131, %v1254
        %v1270 = vadd.f32 %v1132, %v1257
        %v1271 = vadd.f32 %v1133, %v1259
        %v1272 = vadd.f32 %v1134, %v1262
        %v1273 = vadd.f32 %v1135, %v1264
        %v1274 = vld [vmem:[%s1139] sm:$0xf]
        %v1275 = vld [vmem:[%s1139 + $0x4] sm:$0x1]
        %v1276 = vld [vmem:[%s1139 + $0x8] sm:$0xf]
        %v1277 = vld [vmem:[%s1139 + $0xc] sm:$0x1]
        %v1278 = vld [vmem:[%s1139 + $0x10] sm:$0xf]
        %v1279 = vld [vmem:[%s1139 + $0x14] sm:$0x1]
        %v1280 = vld [vmem:[%s1139 + $0x18] sm:$0xf]
        %v1281 = vld [vmem:[%s1139 + $0x1c] sm:$0x1]
        %v1282 = vld [vmem:[%s1139 + $0x20] sm:$0xf]
        %v1283 = vld [vmem:[%s1139 + $0x24] sm:$0x1]
        %v1284 = vld [vmem:[%s1139 + $0x28] sm:$0xf]
        %v1285 = vld [vmem:[%s1139 + $0x2c] sm:$0x1]
        %v1286 = vld [vmem:[%s1139 + $0x30] sm:$0xf]
        %v1287 = vld [vmem:[%s1139 + $0x34] sm:$0x1]
        %v1288 = vld [vmem:[%s1139 + $0x38] sm:$0xf]
        %v1289 = vld [vmem:[%s1139 + $0x3c] sm:$0x1]
        %v1291 = vshrl.u32 %v1274, 16
        %v1293 = vrot.slane %v1291, 4
        %v1294 = vshll.u32 %v1274, 16
        %v1296 = vrot.slane %v1294, 5
        %v1297 = vor.u32 %v1293, %v1296
        %v1298 = vrot.slane %v1297, 4
        %v1300 = vshll.u32 %v1275, 16
        %v1302 = vrot.slane %v1300, 5
        %v1303 = vsel %vm635, %v1298, %v1302
        %v1305 = vshrl.u32 %v1276, 16
        %v1307 = vrot.slane %v1305, 4
        %v1308 = vshll.u32 %v1276, 16
        %v1310 = vrot.slane %v1308, 5
        %v1311 = vor.u32 %v1307, %v1310
        %v1312 = vrot.slane %v1311, 4
        %v1314 = vshll.u32 %v1277, 16
        %v1316 = vrot.slane %v1314, 5
        %v1317 = vsel %vm635, %v1312, %v1316
        %v1319 = vshrl.u32 %v1278, 16
        %v1321 = vrot.slane %v1319, 4
        %v1322 = vshll.u32 %v1278, 16
        %v1324 = vrot.slane %v1322, 5
        %v1325 = vor.u32 %v1321, %v1324
        %v1326 = vrot.slane %v1325, 4
        %v1328 = vshll.u32 %v1279, 16
        %v1330 = vrot.slane %v1328, 5
        %v1331 = vsel %vm635, %v1326, %v1330
        %v1333 = vshrl.u32 %v1280, 16
        %v1335 = vrot.slane %v1333, 4
        %v1336 = vshll.u32 %v1280, 16
        %v1338 = vrot.slane %v1336, 5
        %v1339 = vor.u32 %v1335, %v1338
        %v1340 = vrot.slane %v1339, 4
        %v1342 = vshll.u32 %v1281, 16
        %v1344 = vrot.slane %v1342, 5
        %v1345 = vsel %vm635, %v1340, %v1344
        %v1347 = vshrl.u32 %v1282, 16
        %v1349 = vrot.slane %v1347, 4
        %v1350 = vshll.u32 %v1282, 16
        %v1352 = vrot.slane %v1350, 5
        %v1353 = vor.u32 %v1349, %v1352
        %v1354 = vrot.slane %v1353, 4
        %v1356 = vshll.u32 %v1283, 16
        %v1358 = vrot.slane %v1356, 5
        %v1359 = vsel %vm635, %v1354, %v1358
        %v1361 = vshrl.u32 %v1284, 16
        %v1363 = vrot.slane %v1361, 4
        %v1364 = vshll.u32 %v1284, 16
        %v1366 = vrot.slane %v1364, 5
        %v1367 = vor.u32 %v1363, %v1366
        %v1368 = vrot.slane %v1367, 4
        %v1370 = vshll.u32 %v1285, 16
        %v1372 = vrot.slane %v1370, 5
        %v1373 = vsel %vm635, %v1368, %v1372
        %v1375 = vshrl.u32 %v1286, 16
        %v1377 = vrot.slane %v1375, 4
        %v1378 = vshll.u32 %v1286, 16
        %v1380 = vrot.slane %v1378, 5
        %v1381 = vor.u32 %v1377, %v1380
        %v1382 = vrot.slane %v1381, 4
        %v1384 = vshll.u32 %v1287, 16
        %v1386 = vrot.slane %v1384, 5
        %v1387 = vsel %vm635, %v1382, %v1386
        %v1389 = vshrl.u32 %v1288, 16
        %v1391 = vrot.slane %v1389, 4
        %v1392 = vshll.u32 %v1288, 16
        %v1394 = vrot.slane %v1392, 5
        %v1395 = vor.u32 %v1391, %v1394
        %v1396 = vrot.slane %v1395, 4
        %v1398 = vshll.u32 %v1289, 16
        %v1400 = vrot.slane %v1398, 5
        %v1401 = vsel %vm635, %v1396, %v1400
        %s1402 = scalar_lea.vmem [#allocation3], 256
        %v1403 = vld [vmem:[%s1402] sm:$0xf]
        %v1404 = vld [vmem:[%s1402 + $0x4] sm:$0xf]
        %v1405 = vld [vmem:[%s1402 + $0x8] sm:$0xf]
        %v1406 = vld [vmem:[%s1402 + $0xc] sm:$0xf]
        %v1407 = vld [vmem:[%s1402 + $0x10] sm:$0xf]
        %v1408 = vld [vmem:[%s1402 + $0x14] sm:$0xf]
        %v1409 = vld [vmem:[%s1402 + $0x18] sm:$0xf]
        %v1410 = vld [vmem:[%s1402 + $0x1c] sm:$0xf]
        %v1411 = vld [vmem:[%s1402 + $0x20] sm:$0xf]
        %v1412 = vld [vmem:[%s1402 + $0x24] sm:$0xf]
        %v1413 = vld [vmem:[%s1402 + $0x28] sm:$0xf]
        %v1414 = vld [vmem:[%s1402 + $0x2c] sm:$0xf]
        %v1415 = vld [vmem:[%s1402 + $0x30] sm:$0xf]
        %v1416 = vld [vmem:[%s1402 + $0x34] sm:$0xf]
        %v1417 = vld [vmem:[%s1402 + $0x38] sm:$0xf]
        %v1418 = vld [vmem:[%s1402 + $0x3c] sm:$0xf]
        %v1419 = vunpack.c.l.b16 %v1303
        %v1420 = vunpack.c.l.b16 %v1317
        %v1421 = vunpack.c.l.b16 %v1331
        %v1422 = vunpack.c.l.b16 %v1345
        %v1423 = vunpack.c.l.b16 %v1359
        %v1424 = vunpack.c.l.b16 %v1373
        %v1425 = vunpack.c.l.b16 %v1387
        %v1426 = vunpack.c.l.b16 %v1401
        %v1427 = vpack.c.b16 %v1420, %v1419
        %v1428 = vpack.c.b16 %v1422, %v1421
        %v1429 = vpack.c.b16 %v1424, %v1423
        %v1430 = vpack.c.b16 %v1426, %v1425
        %v1451 = vunpack.c.l.b16 %v1403
        %v1452 = vunpack.c.l.b16 %v1404
        %v1453 = vunpack.c.l.b16 %v1405
        %v1454 = vunpack.c.l.b16 %v1406
        %v1455 = vunpack.c.l.b16 %v1407
        %v1456 = vunpack.c.l.b16 %v1408
        %v1457 = vunpack.c.l.b16 %v1409
        %v1458 = vunpack.c.l.b16 %v1410
        %v1459 = vunpack.c.l.b16 %v1411
        %v1460 = vunpack.c.l.b16 %v1412
        %v1461 = vunpack.c.l.b16 %v1413
        %v1462 = vunpack.c.l.b16 %v1414
        %v1463 = vunpack.c.l.b16 %v1415
        %v1464 = vunpack.c.l.b16 %v1416
        %v1465 = vunpack.c.l.b16 %v1417
        %v1466 = vunpack.c.l.b16 %v1418
        %v1467 = vpack.c.b16 %v1452, %v1451
        %v1468 = vpack.c.b16 %v1454, %v1453
        %v1469 = vpack.c.b16 %v1456, %v1455
        %v1470 = vpack.c.b16 %v1458, %v1457
        %v1471 = vpack.c.b16 %v1460, %v1459
        %v1472 = vpack.c.b16 %v1462, %v1461
        %v1473 = vpack.c.b16 %v1464, %v1463
        %v1474 = vpack.c.b16 %v1466, %v1465
        %1483 = vmatpush.bf16.msra.mxu0 %v1474
        %1484 = vmatpush.bf16.msra.mxu0 %v1473
        %1485 = vmatpush.bf16.msra.mxu0 %v1472
        %1486 = vmatpush.bf16.msra.mxu0 %v1471
        %1487 = vmatpush.bf16.msra.mxu0 %v1470
        %1488 = vmatpush.bf16.msra.mxu0 %v1469
        %1489 = vmatpush.bf16.msra.mxu0 %v1468
        %1490 = vmatpush.bf16.msra.mxu0 %v1467
        %1491 = vmatmul.bf16.gmra.mxu0 %v1427
        %v1492 = vpop.f32.mrf.mxu0
        %v1493 = vadd.f32 0.0, %v1492
        %v1494 = vpop.f32.mrf.mxu0
        %v1495 = vadd.f32 0.0, %v1494
        %1496 = vmatmul.bf16.gmra.mxu0 %v1428
        %v1497 = vpop.f32.mrf.mxu0
        %v1498 = vadd.f32 0.0, %v1497
        %v1499 = vpop.f32.mrf.mxu0
        %v1500 = vadd.f32 0.0, %v1499
        %1501 = vmatmul.bf16.gmra.mxu0 %v1429
        %v1502 = vpop.f32.mrf.mxu0
        %v1503 = vadd.f32 0.0, %v1502
        %v1504 = vpop.f32.mrf.mxu0
        %v1505 = vadd.f32 0.0, %v1504
        %1506 = vmatmul.bf16.gmra.mxu0 %v1430
        %v1507 = vpop.f32.mrf.mxu0
        %v1508 = vadd.f32 0.0, %v1507
        %v1509 = vpop.f32.mrf.mxu0
        %v1510 = vadd.f32 0.0, %v1509
        %1511 = vdwg.mxu0
        %v1512 = vadd.f32 %v1266, %v1493
        %v1513 = vadd.f32 %v1267, %v1495
        %v1514 = vadd.f32 %v1268, %v1498
        %v1515 = vadd.f32 %v1269, %v1500
        %v1516 = vadd.f32 %v1270, %v1503
        %v1517 = vadd.f32 %v1271, %v1505
        %v1518 = vadd.f32 %v1272, %v1508
        %v1519 = vadd.f32 %v1273, %v1510
        %v1520 = vld [vmem:[%s1139] sm:$0xe]
        %v1521 = vld [vmem:[%s1139 + $0x8] sm:$0xe]
        %v1522 = vld [vmem:[%s1139 + $0x10] sm:$0xe]
        %v1523 = vld [vmem:[%s1139 + $0x18] sm:$0xe]
        %v1524 = vld [vmem:[%s1139 + $0x20] sm:$0xe]
        %v1525 = vld [vmem:[%s1139 + $0x28] sm:$0xe]
        %v1526 = vld [vmem:[%s1139 + $0x30] sm:$0xe]
        %v1527 = vld [vmem:[%s1139 + $0x38] sm:$0xe]
        %v1544 = vrot.slane %v1520, 5
        %v1545 = vrot.slane %v1544, 4
        %v1546 = vrot.slane %v1275, 5
        %v1547 = vsel %vm985, %v1545, %v1546
        %v1548 = vrot.slane %v1521, 5
        %v1549 = vrot.slane %v1548, 4
        %v1550 = vrot.slane %v1277, 5
        %v1551 = vsel %vm985, %v1549, %v1550
        %v1552 = vrot.slane %v1522, 5
        %v1553 = vrot.slane %v1552, 4
        %v1554 = vrot.slane %v1279, 5
        %v1555 = vsel %vm985, %v1553, %v1554
        %v1556 = vrot.slane %v1523, 5
        %v1557 = vrot.slane %v1556, 4
        %v1558 = vrot.slane %v1281, 5
        %v1559 = vsel %vm985, %v1557, %v1558
        %v1560 = vrot.slane %v1524, 5
        %v1561 = vrot.slane %v1560, 4
        %v1562 = vrot.slane %v1283, 5
        %v1563 = vsel %vm985, %v1561, %v1562
        %v1564 = vrot.slane %v1525, 5
        %v1565 = vrot.slane %v1564, 4
        %v1566 = vrot.slane %v1285, 5
        %v1567 = vsel %vm985, %v1565, %v1566
        %v1568 = vrot.slane %v1526, 5
        %v1569 = vrot.slane %v1568, 4
        %v1570 = vrot.slane %v1287, 5
        %v1571 = vsel %vm985, %v1569, %v1570
        %v1572 = vrot.slane %v1527, 5
        %v1573 = vrot.slane %v1572, 4
        %v1574 = vrot.slane %v1289, 5
        %v1575 = vsel %vm985, %v1573, %v1574
        %s1576 = scalar_lea.vmem [#allocation3], 320
        %v1577 = vld [vmem:[%s1576] sm:$0xf]
        %v1578 = vld [vmem:[%s1576 + $0x4] sm:$0xf]
        %v1579 = vld [vmem:[%s1576 + $0x8] sm:$0xf]
        %v1580 = vld [vmem:[%s1576 + $0xc] sm:$0xf]
        %v1581 = vld [vmem:[%s1576 + $0x10] sm:$0xf]
        %v1582 = vld [vmem:[%s1576 + $0x14] sm:$0xf]
        %v1583 = vld [vmem:[%s1576 + $0x18] sm:$0xf]
        %v1584 = vld [vmem:[%s1576 + $0x1c] sm:$0xf]
        %v1585 = vld [vmem:[%s1576 + $0x20] sm:$0xf]
        %v1586 = vld [vmem:[%s1576 + $0x24] sm:$0xf]
        %v1587 = vld [vmem:[%s1576 + $0x28] sm:$0xf]
        %v1588 = vld [vmem:[%s1576 + $0x2c] sm:$0xf]
        %v1589 = vld [vmem:[%s1576 + $0x30] sm:$0xf]
        %v1590 = vld [vmem:[%s1576 + $0x34] sm:$0xf]
        %v1591 = vld [vmem:[%s1576 + $0x38] sm:$0xf]
        %v1592 = vld [vmem:[%s1576 + $0x3c] sm:$0xf]
        %v1593 = vunpack.c.l.b16 %v1547
        %v1594 = vunpack.c.l.b16 %v1551
        %v1595 = vunpack.c.l.b16 %v1555
        %v1596 = vunpack.c.l.b16 %v1559
        %v1597 = vunpack.c.l.b16 %v1563
        %v1598 = vunpack.c.l.b16 %v1567
        %v1599 = vunpack.c.l.b16 %v1571
        %v1600 = vunpack.c.l.b16 %v1575
        %v1601 = vpack.c.b16 %v1594, %v1593
        %v1602 = vpack.c.b16 %v1596, %v1595
        %v1603 = vpack.c.b16 %v1598, %v1597
        %v1604 = vpack.c.b16 %v1600, %v1599
        %v1625 = vunpack.c.l.b16 %v1577
        %v1626 = vunpack.c.l.b16 %v1578
        %v1627 = vunpack.c.l.b16 %v1579
        %v1628 = vunpack.c.l.b16 %v1580
        %v1629 = vunpack.c.l.b16 %v1581
        %v1630 = vunpack.c.l.b16 %v1582
        %v1631 = vunpack.c.l.b16 %v1583
        %v1632 = vunpack.c.l.b16 %v1584
        %v1633 = vunpack.c.l.b16 %v1585
        %v1634 = vunpack.c.l.b16 %v1586
        %v1635 = vunpack.c.l.b16 %v1587
        %v1636 = vunpack.c.l.b16 %v1588
        %v1637 = vunpack.c.l.b16 %v1589
        %v1638 = vunpack.c.l.b16 %v1590
        %v1639 = vunpack.c.l.b16 %v1591
        %v1640 = vunpack.c.l.b16 %v1592
        %v1641 = vpack.c.b16 %v1626, %v1625
        %v1642 = vpack.c.b16 %v1628, %v1627
        %v1643 = vpack.c.b16 %v1630, %v1629
        %v1644 = vpack.c.b16 %v1632, %v1631
        %v1645 = vpack.c.b16 %v1634, %v1633
        %v1646 = vpack.c.b16 %v1636, %v1635
        %v1647 = vpack.c.b16 %v1638, %v1637
        %v1648 = vpack.c.b16 %v1640, %v1639
        %1657 = vmatpush.bf16.msra.mxu0 %v1648
        %1658 = vmatpush.bf16.msra.mxu0 %v1647
        %1659 = vmatpush.bf16.msra.mxu0 %v1646
        %1660 = vmatpush.bf16.msra.mxu0 %v1645
        %1661 = vmatpush.bf16.msra.mxu0 %v1644
        %1662 = vmatpush.bf16.msra.mxu0 %v1643
        %1663 = vmatpush.bf16.msra.mxu0 %v1642
        %1664 = vmatpush.bf16.msra.mxu0 %v1641
        %1665 = vmatmul.bf16.gmra.mxu0 %v1601
        %v1666 = vpop.f32.mrf.mxu0
        %v1667 = vadd.f32 0.0, %v1666
        %v1668 = vpop.f32.mrf.mxu0
        %v1669 = vadd.f32 0.0, %v1668
        %1670 = vmatmul.bf16.gmra.mxu0 %v1602
        %v1671 = vpop.f32.mrf.mxu0
        %v1672 = vadd.f32 0.0, %v1671
        %v1673 = vpop.f32.mrf.mxu0
        %v1674 = vadd.f32 0.0, %v1673
        %1675 = vmatmul.bf16.gmra.mxu0 %v1603
        %v1676 = vpop.f32.mrf.mxu0
        %v1677 = vadd.f32 0.0, %v1676
        %v1678 = vpop.f32.mrf.mxu0
        %v1679 = vadd.f32 0.0, %v1678
        %1680 = vmatmul.bf16.gmra.mxu0 %v1604
        %v1681 = vpop.f32.mrf.mxu0
        %v1682 = vadd.f32 0.0, %v1681
        %v1683 = vpop.f32.mrf.mxu0
        %v1684 = vadd.f32 0.0, %v1683
        %1685 = vdwg.mxu0
        %v1686 = vadd.f32 %v1512, %v1667
        %v1687 = vadd.f32 %v1513, %v1669
        %v1688 = vadd.f32 %v1514, %v1672
        %v1689 = vadd.f32 %v1515, %v1674
        %v1690 = vadd.f32 %v1516, %v1677
        %v1691 = vadd.f32 %v1517, %v1679
        %v1692 = vadd.f32 %v1518, %v1682
        %v1693 = vadd.f32 %v1519, %v1684
        %s1694 = sadd.s32 %s597, 2
        %s1695 = smul.u32 %s1694, 2
        %s1696 = smul.addr %s1695, 4
        %s1697 = scalar_lea.vmem [#allocation2], %s1696
        %v1698 = vld [vmem:[%s1697] sm:$0xf]
        %v1699 = vld [vmem:[%s1697 + $0x8] sm:$0xf]
        %v1700 = vld [vmem:[%s1697 + $0x10] sm:$0xf]
        %v1701 = vld [vmem:[%s1697 + $0x18] sm:$0xf]
        %v1702 = vld [vmem:[%s1697 + $0x20] sm:$0xf]
        %v1703 = vld [vmem:[%s1697 + $0x28] sm:$0xf]
        %v1704 = vld [vmem:[%s1697 + $0x30] sm:$0xf]
        %v1705 = vld [vmem:[%s1697 + $0x38] sm:$0xf]
        %s1706 = scalar_lea.vmem [#allocation3], 384
        %v1707 = vld [vmem:[%s1706] sm:$0xf]
        %v1708 = vld [vmem:[%s1706 + $0x4] sm:$0xf]
        %v1709 = vld [vmem:[%s1706 + $0x8] sm:$0xf]
        %v1710 = vld [vmem:[%s1706 + $0xc] sm:$0xf]
        %v1711 = vld [vmem:[%s1706 + $0x10] sm:$0xf]
        %v1712 = vld [vmem:[%s1706 + $0x14] sm:$0xf]
        %v1713 = vld [vmem:[%s1706 + $0x18] sm:$0xf]
        %v1714 = vld [vmem:[%s1706 + $0x1c] sm:$0xf]
        %v1715 = vld [vmem:[%s1706 + $0x20] sm:$0xf]
        %v1716 = vld [vmem:[%s1706 + $0x24] sm:$0xf]
        %v1717 = vld [vmem:[%s1706 + $0x28] sm:$0xf]
        %v1718 = vld [vmem:[%s1706 + $0x2c] sm:$0xf]
        %v1719 = vld [vmem:[%s1706 + $0x30] sm:$0xf]
        %v1720 = vld [vmem:[%s1706 + $0x34] sm:$0xf]
        %v1721 = vld [vmem:[%s1706 + $0x38] sm:$0xf]
        %v1722 = vld [vmem:[%s1706 + $0x3c] sm:$0xf]
        %v1731 = vunpack.c.l.b16 %v1698
        %v1732 = vunpack.c.l.b16 %v1699
        %v1733 = vunpack.c.l.b16 %v1700
        %v1734 = vunpack.c.l.b16 %v1701
        %v1735 = vunpack.c.l.b16 %v1702
        %v1736 = vunpack.c.l.b16 %v1703
        %v1737 = vunpack.c.l.b16 %v1704
        %v1738 = vunpack.c.l.b16 %v1705
        %v1739 = vpack.c.b16 %v1732, %v1731
        %v1740 = vpack.c.b16 %v1734, %v1733
        %v1741 = vpack.c.b16 %v1736, %v1735
        %v1742 = vpack.c.b16 %v1738, %v1737
        %v1763 = vunpack.c.l.b16 %v1707
        %v1764 = vunpack.c.l.b16 %v1708
        %v1765 = vunpack.c.l.b16 %v1709
        %v1766 = vunpack.c.l.b16 %v1710
        %v1767 = vunpack.c.l.b16 %v1711
        %v1768 = vunpack.c.l.b16 %v1712
        %v1769 = vunpack.c.l.b16 %v1713
        %v1770 = vunpack.c.l.b16 %v1714
        %v1771 = vunpack.c.l.b16 %v1715
        %v1772 = vunpack.c.l.b16 %v1716
        %v1773 = vunpack.c.l.b16 %v1717
        %v1774 = vunpack.c.l.b16 %v1718
        %v1775 = vunpack.c.l.b16 %v1719
        %v1776 = vunpack.c.l.b16 %v1720
        %v1777 = vunpack.c.l.b16 %v1721
        %v1778 = vunpack.c.l.b16 %v1722
        %v1779 = vpack.c.b16 %v1764, %v1763
        %v1780 = vpack.c.b16 %v1766, %v1765
        %v1781 = vpack.c.b16 %v1768, %v1767
        %v1782 = vpack.c.b16 %v1770, %v1769
        %v1783 = vpack.c.b16 %v1772, %v1771
        %v1784 = vpack.c.b16 %v1774, %v1773
        %v1785 = vpack.c.b16 %v1776, %v1775
        %v1786 = vpack.c.b16 %v1778, %v1777
        %1795 = vmatpush.bf16.msra.mxu0 %v1786
        %1796 = vmatpush.bf16.msra.mxu0 %v1785
        %1797 = vmatpush.bf16.msra.mxu0 %v1784
        %1798 = vmatpush.bf16.msra.mxu0 %v1783
        %1799 = vmatpush.bf16.msra.mxu0 %v1782
        %1800 = vmatpush.bf16.msra.mxu0 %v1781
        %1801 = vmatpush.bf16.msra.mxu0 %v1780
        %1802 = vmatpush.bf16.msra.mxu0 %v1779
        %1803 = vmatmul.bf16.gmra.mxu0 %v1739
        %v1804 = vpop.f32.mrf.mxu0
        %v1805 = vadd.f32 0.0, %v1804
        %v1806 = vpop.f32.mrf.mxu0
        %v1807 = vadd.f32 0.0, %v1806
        %1808 = vmatmul.bf16.gmra.mxu0 %v1740
        %v1809 = vpop.f32.mrf.mxu0
        %v1810 = vadd.f32 0.0, %v1809
        %v1811 = vpop.f32.mrf.mxu0
        %v1812 = vadd.f32 0.0, %v1811
        %1813 = vmatmul.bf16.gmra.mxu0 %v1741
        %v1814 = vpop.f32.mrf.mxu0
        %v1815 = vadd.f32 0.0, %v1814
        %v1816 = vpop.f32.mrf.mxu0
        %v1817 = vadd.f32 0.0, %v1816
        %1818 = vmatmul.bf16.gmra.mxu0 %v1742
        %v1819 = vpop.f32.mrf.mxu0
        %v1820 = vadd.f32 0.0, %v1819
        %v1821 = vpop.f32.mrf.mxu0
        %v1822 = vadd.f32 0.0, %v1821
        %1823 = vdwg.mxu0
        %v1824 = vadd.f32 %v1686, %v1805
        %v1825 = vadd.f32 %v1687, %v1807
        %v1826 = vadd.f32 %v1688, %v1810
        %v1827 = vadd.f32 %v1689, %v1812
        %v1828 = vadd.f32 %v1690, %v1815
        %v1829 = vadd.f32 %v1691, %v1817
        %v1830 = vadd.f32 %v1692, %v1820
        %v1831 = vadd.f32 %v1693, %v1822
        %v1832 = vld [vmem:[%s1697] sm:$0xf]
        %v1833 = vld [vmem:[%s1697 + $0x4] sm:$0x1]
        %v1834 = vld [vmem:[%s1697 + $0x8] sm:$0xf]
        %v1835 = vld [vmem:[%s1697 + $0xc] sm:$0x1]
        %v1836 = vld [vmem:[%s1697 + $0x10] sm:$0xf]
        %v1837 = vld [vmem:[%s1697 + $0x14] sm:$0x1]
        %v1838 = vld [vmem:[%s1697 + $0x18] sm:$0xf]
        %v1839 = vld [vmem:[%s1697 + $0x1c] sm:$0x1]
        %v1840 = vld [vmem:[%s1697 + $0x20] sm:$0xf]
        %v1841 = vld [vmem:[%s1697 + $0x24] sm:$0x1]
        %v1842 = vld [vmem:[%s1697 + $0x28] sm:$0xf]
        %v1843 = vld [vmem:[%s1697 + $0x2c] sm:$0x1]
        %v1844 = vld [vmem:[%s1697 + $0x30] sm:$0xf]
        %v1845 = vld [vmem:[%s1697 + $0x34] sm:$0x1]
        %v1846 = vld [vmem:[%s1697 + $0x38] sm:$0xf]
        %v1847 = vld [vmem:[%s1697 + $0x3c] sm:$0x1]
        %v1849 = vshrl.u32 %v1832, 16
        %v1851 = vrot.slane %v1849, 4
        %v1852 = vshll.u32 %v1832, 16
        %v1854 = vrot.slane %v1852, 5
        %v1855 = vor.u32 %v1851, %v1854
        %v1856 = vrot.slane %v1855, 4
        %v1858 = vshll.u32 %v1833, 16
        %v1860 = vrot.slane %v1858, 5
        %v1861 = vsel %vm635, %v1856, %v1860
        %v1863 = vshrl.u32 %v1834, 16
        %v1865 = vrot.slane %v1863, 4
        %v1866 = vshll.u32 %v1834, 16
        %v1868 = vrot.slane %v1866, 5
        %v1869 = vor.u32 %v1865, %v1868
        %v1870 = vrot.slane %v1869, 4
        %v1872 = vshll.u32 %v1835, 16
        %v1874 = vrot.slane %v1872, 5
        %v1875 = vsel %vm635, %v1870, %v1874
        %v1877 = vshrl.u32 %v1836, 16
        %v1879 = vrot.slane %v1877, 4
        %v1880 = vshll.u32 %v1836, 16
        %v1882 = vrot.slane %v1880, 5
        %v1883 = vor.u32 %v1879, %v1882
        %v1884 = vrot.slane %v1883, 4
        %v1886 = vshll.u32 %v1837, 16
        %v1888 = vrot.slane %v1886, 5
        %v1889 = vsel %vm635, %v1884, %v1888
        %v1891 = vshrl.u32 %v1838, 16
        %v1893 = vrot.slane %v1891, 4
        %v1894 = vshll.u32 %v1838, 16
        %v1896 = vrot.slane %v1894, 5
        %v1897 = vor.u32 %v1893, %v1896
        %v1898 = vrot.slane %v1897, 4
        %v1900 = vshll.u32 %v1839, 16
        %v1902 = vrot.slane %v1900, 5
        %v1903 = vsel %vm635, %v1898, %v1902
        %v1905 = vshrl.u32 %v1840, 16
        %v1907 = vrot.slane %v1905, 4
        %v1908 = vshll.u32 %v1840, 16
        %v1910 = vrot.slane %v1908, 5
        %v1911 = vor.u32 %v1907, %v1910
        %v1912 = vrot.slane %v1911, 4
        %v1914 = vshll.u32 %v1841, 16
        %v1916 = vrot.slane %v1914, 5
        %v1917 = vsel %vm635, %v1912, %v1916
        %v1919 = vshrl.u32 %v1842, 16
        %v1921 = vrot.slane %v1919, 4
        %v1922 = vshll.u32 %v1842, 16
        %v1924 = vrot.slane %v1922, 5
        %v1925 = vor.u32 %v1921, %v1924
        %v1926 = vrot.slane %v1925, 4
        %v1928 = vshll.u32 %v1843, 16
        %v1930 = vrot.slane %v1928, 5
        %v1931 = vsel %vm635, %v1926, %v1930
        %v1933 = vshrl.u32 %v1844, 16
        %v1935 = vrot.slane %v1933, 4
        %v1936 = vshll.u32 %v1844, 16
        %v1938 = vrot.slane %v1936, 5
        %v1939 = vor.u32 %v1935, %v1938
        %v1940 = vrot.slane %v1939, 4
        %v1942 = vshll.u32 %v1845, 16
        %v1944 = vrot.slane %v1942, 5
        %v1945 = vsel %vm635, %v1940, %v1944
        %v1947 = vshrl.u32 %v1846, 16
        %v1949 = vrot.slane %v1947, 4
        %v1950 = vshll.u32 %v1846, 16
        %v1952 = vrot.slane %v1950, 5
        %v1953 = vor.u32 %v1949, %v1952
        %v1954 = vrot.slane %v1953, 4
        %v1956 = vshll.u32 %v1847, 16
        %v1958 = vrot.slane %v1956, 5
        %v1959 = vsel %vm635, %v1954, %v1958
        %s1960 = scalar_lea.vmem [#allocation3], 448
        %v1961 = vld [vmem:[%s1960] sm:$0xf]
        %v1962 = vld [vmem:[%s1960 + $0x4] sm:$0xf]
        %v1963 = vld [vmem:[%s1960 + $0x8] sm:$0xf]
        %v1964 = vld [vmem:[%s1960 + $0xc] sm:$0xf]
        %v1965 = vld [vmem:[%s1960 + $0x10] sm:$0xf]
        %v1966 = vld [vmem:[%s1960 + $0x14] sm:$0xf]
        %v1967 = vld [vmem:[%s1960 + $0x18] sm:$0xf]
        %v1968 = vld [vmem:[%s1960 + $0x1c] sm:$0xf]
        %v1969 = vld [vmem:[%s1960 + $0x20] sm:$0xf]
        %v1970 = vld [vmem:[%s1960 + $0x24] sm:$0xf]
        %v1971 = vld [vmem:[%s1960 + $0x28] sm:$0xf]
        %v1972 = vld [vmem:[%s1960 + $0x2c] sm:$0xf]
        %v1973 = vld [vmem:[%s1960 + $0x30] sm:$0xf]
        %v1974 = vld [vmem:[%s1960 + $0x34] sm:$0xf]
        %v1975 = vld [vmem:[%s1960 + $0x38] sm:$0xf]
        %v1976 = vld [vmem:[%s1960 + $0x3c] sm:$0xf]
        %v1977 = vunpack.c.l.b16 %v1861
        %v1978 = vunpack.c.l.b16 %v1875
        %v1979 = vunpack.c.l.b16 %v1889
        %v1980 = vunpack.c.l.b16 %v1903
        %v1981 = vunpack.c.l.b16 %v1917
        %v1982 = vunpack.c.l.b16 %v1931
        %v1983 = vunpack.c.l.b16 %v1945
        %v1984 = vunpack.c.l.b16 %v1959
        %v1985 = vpack.c.b16 %v1978, %v1977
        %v1986 = vpack.c.b16 %v1980, %v1979
        %v1987 = vpack.c.b16 %v1982, %v1981
        %v1988 = vpack.c.b16 %v1984, %v1983
        %v2009 = vunpack.c.l.b16 %v1961
        %v2010 = vunpack.c.l.b16 %v1962
        %v2011 = vunpack.c.l.b16 %v1963
        %v2012 = vunpack.c.l.b16 %v1964
        %v2013 = vunpack.c.l.b16 %v1965
        %v2014 = vunpack.c.l.b16 %v1966
        %v2015 = vunpack.c.l.b16 %v1967
        %v2016 = vunpack.c.l.b16 %v1968
        %v2017 = vunpack.c.l.b16 %v1969
        %v2018 = vunpack.c.l.b16 %v1970
        %v2019 = vunpack.c.l.b16 %v1971
        %v2020 = vunpack.c.l.b16 %v1972
        %v2021 = vunpack.c.l.b16 %v1973
        %v2022 = vunpack.c.l.b16 %v1974
        %v2023 = vunpack.c.l.b16 %v1975
        %v2024 = vunpack.c.l.b16 %v1976
        %v2025 = vpack.c.b16 %v2010, %v2009
        %v2026 = vpack.c.b16 %v2012, %v2011
        %v2027 = vpack.c.b16 %v2014, %v2013
        %v2028 = vpack.c.b16 %v2016, %v2015
        %v2029 = vpack.c.b16 %v2018, %v2017
        %v2030 = vpack.c.b16 %v2020, %v2019
        %v2031 = vpack.c.b16 %v2022, %v2021
        %v2032 = vpack.c.b16 %v2024, %v2023
        %2041 = vmatpush.bf16.msra.mxu0 %v2032
        %2042 = vmatpush.bf16.msra.mxu0 %v2031
        %2043 = vmatpush.bf16.msra.mxu0 %v2030
        %2044 = vmatpush.bf16.msra.mxu0 %v2029
        %2045 = vmatpush.bf16.msra.mxu0 %v2028
        %2046 = vmatpush.bf16.msra.mxu0 %v2027
        %2047 = vmatpush.bf16.msra.mxu0 %v2026
        %2048 = vmatpush.bf16.msra.mxu0 %v2025
        %2049 = vmatmul.bf16.gmra.mxu0 %v1985
        %v2050 = vpop.f32.mrf.mxu0
        %v2051 = vadd.f32 0.0, %v2050
        %v2052 = vpop.f32.mrf.mxu0
        %v2053 = vadd.f32 0.0, %v2052
        %2054 = vmatmul.bf16.gmra.mxu0 %v1986
        %v2055 = vpop.f32.mrf.mxu0
        %v2056 = vadd.f32 0.0, %v2055
        %v2057 = vpop.f32.mrf.mxu0
        %v2058 = vadd.f32 0.0, %v2057
        %2059 = vmatmul.bf16.gmra.mxu0 %v1987
        %v2060 = vpop.f32.mrf.mxu0
        %v2061 = vadd.f32 0.0, %v2060
        %v2062 = vpop.f32.mrf.mxu0
        %v2063 = vadd.f32 0.0, %v2062
        %2064 = vmatmul.bf16.gmra.mxu0 %v1988
        %v2065 = vpop.f32.mrf.mxu0
        %v2066 = vadd.f32 0.0, %v2065
        %v2067 = vpop.f32.mrf.mxu0
        %v2068 = vadd.f32 0.0, %v2067
        %2069 = vdwg.mxu0
        %v2070 = vadd.f32 %v1824, %v2051
        %v2071 = vadd.f32 %v1825, %v2053
        %v2072 = vadd.f32 %v1826, %v2056
        %v2073 = vadd.f32 %v1827, %v2058
        %v2074 = vadd.f32 %v1828, %v2061
        %v2075 = vadd.f32 %v1829, %v2063
        %v2076 = vadd.f32 %v1830, %v2066
        %v2077 = vadd.f32 %v1831, %v2068
        %v2078 = vld [vmem:[%s1697] sm:$0xe]
        %v2079 = vld [vmem:[%s1697 + $0x8] sm:$0xe]
        %v2080 = vld [vmem:[%s1697 + $0x10] sm:$0xe]
        %v2081 = vld [vmem:[%s1697 + $0x18] sm:$0xe]
        %v2082 = vld [vmem:[%s1697 + $0x20] sm:$0xe]
        %v2083 = vld [vmem:[%s1697 + $0x28] sm:$0xe]
        %v2084 = vld [vmem:[%s1697 + $0x30] sm:$0xe]
        %v2085 = vld [vmem:[%s1697 + $0x38] sm:$0xe]
        %v2102 = vrot.slane %v2078, 5
        %v2103 = vrot.slane %v2102, 4
        %v2104 = vrot.slane %v1833, 5
        %v2105 = vsel %vm985, %v2103, %v2104
        %v2106 = vrot.slane %v2079, 5
        %v2107 = vrot.slane %v2106, 4
        %v2108 = vrot.slane %v1835, 5
        %v2109 = vsel %vm985, %v2107, %v2108
        %v2110 = vrot.slane %v2080, 5
        %v2111 = vrot.slane %v2110, 4
        %v2112 = vrot.slane %v1837, 5
        %v2113 = vsel %vm985, %v2111, %v2112
        %v2114 = vrot.slane %v2081, 5
        %v2115 = vrot.slane %v2114, 4
        %v2116 = vrot.slane %v1839, 5
        %v2117 = vsel %vm985, %v2115, %v2116
        %v2118 = vrot.slane %v2082, 5
        %v2119 = vrot.slane %v2118, 4
        %v2120 = vrot.slane %v1841, 5
        %v2121 = vsel %vm985, %v2119, %v2120
        %v2122 = vrot.slane %v2083, 5
        %v2123 = vrot.slane %v2122, 4
        %v2124 = vrot.slane %v1843, 5
        %v2125 = vsel %vm985, %v2123, %v2124
        %v2126 = vrot.slane %v2084, 5
        %v2127 = vrot.slane %v2126, 4
        %v2128 = vrot.slane %v1845, 5
        %v2129 = vsel %vm985, %v2127, %v2128
        %v2130 = vrot.slane %v2085, 5
        %v2131 = vrot.slane %v2130, 4
        %v2132 = vrot.slane %v1847, 5
        %v2133 = vsel %vm985, %v2131, %v2132
        %s2134 = scalar_lea.vmem [#allocation3], 512
        %v2135 = vld [vmem:[%s2134] sm:$0xf]
        %v2136 = vld [vmem:[%s2134 + $0x4] sm:$0xf]
        %v2137 = vld [vmem:[%s2134 + $0x8] sm:$0xf]
        %v2138 = vld [vmem:[%s2134 + $0xc] sm:$0xf]
        %v2139 = vld [vmem:[%s2134 + $0x10] sm:$0xf]
        %v2140 = vld [vmem:[%s2134 + $0x14] sm:$0xf]
        %v2141 = vld [vmem:[%s2134 + $0x18] sm:$0xf]
        %v2142 = vld [vmem:[%s2134 + $0x1c] sm:$0xf]
        %v2143 = vld [vmem:[%s2134 + $0x20] sm:$0xf]
        %v2144 = vld [vmem:[%s2134 + $0x24] sm:$0xf]
        %v2145 = vld [vmem:[%s2134 + $0x28] sm:$0xf]
        %v2146 = vld [vmem:[%s2134 + $0x2c] sm:$0xf]
        %v2147 = vld [vmem:[%s2134 + $0x30] sm:$0xf]
        %v2148 = vld [vmem:[%s2134 + $0x34] sm:$0xf]
        %v2149 = vld [vmem:[%s2134 + $0x38] sm:$0xf]
        %v2150 = vld [vmem:[%s2134 + $0x3c] sm:$0xf]
        %v2151 = vunpack.c.l.b16 %v2105
        %v2152 = vunpack.c.l.b16 %v2109
        %v2153 = vunpack.c.l.b16 %v2113
        %v2154 = vunpack.c.l.b16 %v2117
        %v2155 = vunpack.c.l.b16 %v2121
        %v2156 = vunpack.c.l.b16 %v2125
        %v2157 = vunpack.c.l.b16 %v2129
        %v2158 = vunpack.c.l.b16 %v2133
        %v2159 = vpack.c.b16 %v2152, %v2151
        %v2160 = vpack.c.b16 %v2154, %v2153
        %v2161 = vpack.c.b16 %v2156, %v2155
        %v2162 = vpack.c.b16 %v2158, %v2157
        %v2183 = vunpack.c.l.b16 %v2135
        %v2184 = vunpack.c.l.b16 %v2136
        %v2185 = vunpack.c.l.b16 %v2137
        %v2186 = vunpack.c.l.b16 %v2138
        %v2187 = vunpack.c.l.b16 %v2139
        %v2188 = vunpack.c.l.b16 %v2140
        %v2189 = vunpack.c.l.b16 %v2141
        %v2190 = vunpack.c.l.b16 %v2142
        %v2191 = vunpack.c.l.b16 %v2143
        %v2192 = vunpack.c.l.b16 %v2144
        %v2193 = vunpack.c.l.b16 %v2145
        %v2194 = vunpack.c.l.b16 %v2146
        %v2195 = vunpack.c.l.b16 %v2147
        %v2196 = vunpack.c.l.b16 %v2148
        %v2197 = vunpack.c.l.b16 %v2149
        %v2198 = vunpack.c.l.b16 %v2150
        %v2199 = vpack.c.b16 %v2184, %v2183
        %v2200 = vpack.c.b16 %v2186, %v2185
        %v2201 = vpack.c.b16 %v2188, %v2187
        %v2202 = vpack.c.b16 %v2190, %v2189
        %v2203 = vpack.c.b16 %v2192, %v2191
        %v2204 = vpack.c.b16 %v2194, %v2193
        %v2205 = vpack.c.b16 %v2196, %v2195
        %v2206 = vpack.c.b16 %v2198, %v2197
        %2215 = vmatpush.bf16.msra.mxu0 %v2206
        %2216 = vmatpush.bf16.msra.mxu0 %v2205
        %2217 = vmatpush.bf16.msra.mxu0 %v2204
        %2218 = vmatpush.bf16.msra.mxu0 %v2203
        %2219 = vmatpush.bf16.msra.mxu0 %v2202
        %2220 = vmatpush.bf16.msra.mxu0 %v2201
        %2221 = vmatpush.bf16.msra.mxu0 %v2200
        %2222 = vmatpush.bf16.msra.mxu0 %v2199
        %2223 = vmatmul.bf16.gmra.mxu0 %v2159
        %v2224 = vpop.f32.mrf.mxu0
        %v2225 = vadd.f32 0.0, %v2224
        %v2226 = vpop.f32.mrf.mxu0
        %v2227 = vadd.f32 0.0, %v2226
        %2228 = vmatmul.bf16.gmra.mxu0 %v2160
        %v2229 = vpop.f32.mrf.mxu0
        %v2230 = vadd.f32 0.0, %v2229
        %v2231 = vpop.f32.mrf.mxu0
        %v2232 = vadd.f32 0.0, %v2231
        %2233 = vmatmul.bf16.gmra.mxu0 %v2161
        %v2234 = vpop.f32.mrf.mxu0
        %v2235 = vadd.f32 0.0, %v2234
        %v2236 = vpop.f32.mrf.mxu0
        %v2237 = vadd.f32 0.0, %v2236
        %2238 = vmatmul.bf16.gmra.mxu0 %v2162
        %v2239 = vpop.f32.mrf.mxu0
        %v2240 = vadd.f32 0.0, %v2239
        %v2241 = vpop.f32.mrf.mxu0
        %v2242 = vadd.f32 0.0, %v2241
        %2243 = vdwg.mxu0
        %v2244 = vadd.f32 %v2070, %v2225
        %v2245 = vadd.f32 %v2071, %v2227
        %v2246 = vadd.f32 %v2072, %v2230
        %v2247 = vadd.f32 %v2073, %v2232
        %v2248 = vadd.f32 %v2074, %v2235
        %v2249 = vadd.f32 %v2075, %v2237
        %v2250 = vadd.f32 %v2076, %v2240
        %v2251 = vadd.f32 %v2077, %v2242
        %v2252 = vld [vmem:[%s5] sm:$0x1]
        %v2254 = vperm.slane %v2252, 0
        %v2256 = vmul.f32 %v2244, %v2254
        %v2257 = vmul.f32 %v2245, %v2254
        %v2258 = vmul.f32 %v2246, %v2254
        %v2259 = vmul.f32 %v2247, %v2254
        %v2260 = vmul.f32 %v2248, %v2254
        %v2261 = vmul.f32 %v2249, %v2254
        %v2262 = vmul.f32 %v2250, %v2254
        %v2263 = vmul.f32 %v2251, %v2254
        %v2264 = vld [vmem:[%s6] sm:$0x1]
        %v2266 = vperm.slane %v2264, 0
        %v2268 = vadd.f32 %v2256, %v2266
        %v2269 = vadd.f32 %v2257, %v2266
        %v2270 = vadd.f32 %v2258, %v2266
        %v2271 = vadd.f32 %v2259, %v2266
        %v2272 = vadd.f32 %v2260, %v2266
        %v2273 = vadd.f32 %v2261, %v2266
        %v2274 = vadd.f32 %v2262, %v2266
        %v2275 = vadd.f32 %v2263, %v2266
        %v2276 = vmax.f32 %v2268, 0.0
        %v2277 = vmax.f32 %v2269, 0.0
        %v2278 = vmax.f32 %v2270, 0.0
        %v2279 = vmax.f32 %v2271, 0.0
        %v2280 = vmax.f32 %v2272, 0.0
        %v2281 = vmax.f32 %v2273, 0.0
        %v2282 = vmax.f32 %v2274, 0.0
        %v2283 = vmax.f32 %v2275, 0.0
        %v2284 = vpack.c.bf16 %v2276, %v2276
        %v2285 = vpack.c.bf16 %v2277, %v2277
        %v2286 = vpack.c.bf16 %v2278, %v2278
        %v2287 = vpack.c.bf16 %v2279, %v2279
        %v2288 = vpack.c.bf16 %v2280, %v2280
        %v2289 = vpack.c.bf16 %v2281, %v2281
        %v2290 = vpack.c.bf16 %v2282, %v2282
        %v2291 = vpack.c.bf16 %v2283, %v2283
        %2292 = vst [vmem:[%s317] sm:$0xf] %v2284
        %2293 = vst [vmem:[%s317 + $0x4] sm:$0xf] %v2285
        %2294 = vst [vmem:[%s317 + $0x8] sm:$0xf] %v2286
        %2295 = vst [vmem:[%s317 + $0xc] sm:$0xf] %v2287
        %2296 = vst [vmem:[%s317 + $0x10] sm:$0xf] %v2288
        %2297 = vst [vmem:[%s317 + $0x14] sm:$0xf] %v2289
        %2298 = vst [vmem:[%s317 + $0x18] sm:$0xf] %v2290
        %2299 = vst [vmem:[%s317 + $0x1c] sm:$0xf] %v2291
        %s2300 = smul.u32 8, %s24
        %p2301 = scmp.lt.s32.totalorder %s23, 1
        %s2302 = scalar_select %p2301, %s23, 1
        %p2303 = scmp.lt.s32.totalorder %s2300, 7
        %s2304 = scalar_select %p2303, %s2300, 7
        %s2305 = smul.addr %s2302, 8
        %s2306 = sadd.s32 %s2304, %s2305
        %s2307 = smul.addr %s2306, 4
        %s2308 = scalar_lea.vmem %s7, %s2307
        // Predicated region
        $region57: #{bottleneck_forward.3} parent=47 // pred_check
          %p2309 = pneg %p203
        $region58: #{bottleneck_forward.3} parent=47 // pred_check_branch
          %2311 = sbr.rel (%p2309) target = $region60
        $region59: #{bottleneck_forward.3} parent=47 // pred_region
          %s2312 = smul.u32 8, %s24
        $region60: #{bottleneck_forward.3} parent=47 // pred_fallthru
          _
      $region48: #{bottleneck_forward.3} parent=5 // pred_fallthru
        _
      %p2313 = scmp.le.s32.totalorder 2, %s14
      // Predicated region
      $region61: #{bottleneck_forward.3} parent=5 // pred_check
        %p2314 = pneg %p2313
      $region62: #{bottleneck_forward.3} parent=5 // pred_check_branch
        %2316 = sbr.rel (%p2314) target = $region64
      $region63: #{bottleneck_forward.3} parent=5 // pred_region
        %s2317 = ssub.s32 %s14, 2
        // Predicated region
        $region65: #{bottleneck_forward.3} parent=63 // pred_check
          %p2318 = pneg %p209
        $region66: #{bottleneck_forward.3} parent=63 // pred_check_branch
          %2320 = sbr.rel (%p2318) target = $region68
        $region67: #{bottleneck_forward.3} parent=63 // pred_region
          %s2321 = smul.u32 8, %s26
          %p2322 = scmp.lt.s32.totalorder %s25, 1
          %s2323 = scalar_select %p2322, %s25, 1
          %p2324 = scmp.lt.s32.totalorder %s2321, 7
          %s2325 = scalar_select %p2324, %s2321, 7
          %s2326 = smul.addr %s2323, 8
          %s2327 = sadd.s32 %s2325, %s2326
          %s2328 = smul.addr %s2327, 4
          %s2329 = scalar_lea.vmem %s7, %s2328
        $region68: #{bottleneck_forward.3} parent=63 // pred_fallthru
          _
      $region64: #{bottleneck_forward.3} parent=5 // pred_fallthru
        _
    $region6: #{bottleneck_forward.3} parent=1 // loop_footer
      %s18 = sadd.s32 1, %s14
    $region7: #{bottleneck_forward.3} parent=1 // loop_footer_branch
      %13 = sbr.rel target = $region3
    $region8: #{bottleneck_forward.3} parent=1 // loop_exit
      _
    %2330 = vsyncpa [#allocation4], 1
    %s2331 = scalar_lea.sflag [#allocation4], 1
    %2332 = vsyncpa %s2331, 1

</llo_original>
